<compile_context>
chip_gen: v5e
topology: v5e:2x2
jax: 0.10.0
libtpu: 0.0.40
codegen_flags: <defaults>
</compile_context>

<pallas_src>
import jax
import jax.numpy as jnp
from jax import lax
from jax.experimental import pallas as pl
from jax.experimental.pallas import tpu as pltpu


# ----------------------------------------------------------------------------
# Fused Pallas kernel: 3 x (XW -> LeakyReLU -> A@ -> A@) + sigmoid(Z Z^T)
# ----------------------------------------------------------------------------
def _leaky_relu_02(x):
    # LeakyReLU(negative_slope=0.2) == max(x, 0.2*x) since 0.2 < 1.
    return jnp.maximum(x, 0.2 * x)


def _igae_fused_kernel(x_ref, adj_ref, w1_ref, w2_ref, w3_ref,
                       packed_ref, gram_ref):
    adj = adj_ref[...]                                   # loaded from HBM once

    # ---- layer 1: support = LeakyReLU(X @ W1); z1 = A @ support; az1 = A @ z1
    s1 = _leaky_relu_02(
        jnp.dot(x_ref[...], w1_ref[...], preferred_element_type=jnp.float32))
    z1 = jnp.dot(adj, s1, preferred_element_type=jnp.float32)
    az1 = jnp.dot(adj, z1, preferred_element_type=jnp.float32)

    # ---- layer 2
    s2 = _leaky_relu_02(
        jnp.dot(z1, w2_ref[...], preferred_element_type=jnp.float32))
    z2 = jnp.dot(adj, s2, preferred_element_type=jnp.float32)
    az2 = jnp.dot(adj, z2, preferred_element_type=jnp.float32)

    # ---- layer 3 (no activation)
    s3 = jnp.dot(z2, w3_ref[...], preferred_element_type=jnp.float32)
    z3 = jnp.dot(adj, s3, preferred_element_type=jnp.float32)
    az3 = jnp.dot(adj, z3, preferred_element_type=jnp.float32)

    # ---- adjacency reconstruction: sigmoid(Z Z^T).
    # Contract the last dim of both operands -> transpose folded into MXU feed.
    gram = lax.dot_general(z3, z3, (((1,), (1,)), ((), ())),
                           preferred_element_type=jnp.float32)
    gram_ref[...] = jax.nn.sigmoid(gram)

    # ---- one lane-dense packed output slab [N, P] (P a multiple of 128):
    #      [ z1 | az1 | z2 | az2 | z_igae | az3 | zero-pad ]
    packed = jnp.concatenate([z1, az1, z2, az2, z3, az3], axis=1)
    pad = packed_ref.shape[1] - packed.shape[1]
    if pad > 0:
        packed = jnp.pad(packed, ((0, 0), (0, pad)))
    packed_ref[...] = packed


# ----------------------------------------------------------------------------
# Wrapper around pallas_call (single fused launch) + output unpacking
# ----------------------------------------------------------------------------
def igae_encoder_forward(x, adj, params):
    w1, w2, w3 = params["w1"], params["w2"], params["w3"]
    n = x.shape[0]
    d1, d2, d3 = w1.shape[1], w2.shape[1], w3.shape[1]

    raw_width = 2 * (d1 + d2 + d3)
    packed_width = max(128, ((raw_width + 127) // 128) * 128)  # lane-dense

    packed, z_igae_adj = pl.pallas_call(
        _igae_fused_kernel,
        grid=(1,),
        in_specs=[
            pl.BlockSpec(x.shape, lambda i: (0, 0)),
            pl.BlockSpec(adj.shape, lambda i: (0, 0)),
            pl.BlockSpec(w1.shape, lambda i: (0, 0)),
            pl.BlockSpec(w2.shape, lambda i: (0, 0)),
            pl.BlockSpec(w3.shape, lambda i: (0, 0)),
        ],
        out_specs=[
            pl.BlockSpec((n, packed_width), lambda i: (0, 0)),
            pl.BlockSpec((n, n), lambda i: (0, 0)),
        ],
        out_shape=[
            jax.ShapeDtypeStruct((n, packed_width), jnp.float32),
            jax.ShapeDtypeStruct((n, n), jnp.float32),
        ],
        compiler_params=pltpu.CompilerParams(
            dimension_semantics=("arbitrary",),
        ),
    )(x, adj, w1, w2, w3)

    # Slice the lane-dense slab back into the module's outputs (layout only).
    o = 0
    z_1 = packed[:, o:o + d1]; o += d1
    az_1 = packed[:, o:o + d1]; o += d1
    z_2 = packed[:, o:o + d2]; o += d2
    az_2 = packed[:, o:o + d2]; o += d2
    z_igae = packed[:, o:o + d3]; o += d3
    az_3 = packed[:, o:o + d3]; o += d3

    return z_igae, z_igae_adj, [az_1, az_2, az_3], [z_1, z_2, z_igae]


# ----------------------------------------------------------------------------
# Pure-JAX reference (matches the PyTorch module) for a correctness check
# ----------------------------------------------------------------------------
def _reference_forward(x, adj, params):
    def layer(h, w, active):
        s = h @ w
        if active:
            s = jnp.where(s >= 0, s, 0.2 * s)
        z = adj @ s
        az = adj @ z
        return z, az

    z1, az1 = layer(x, params["w1"], True)
    z2, az2 = layer(z1, params["w2"], True)
    z3, az3 = layer(z2, params["w3"], False)
    g = jax.nn.sigmoid(z3 @ z3.T)
    return z3, g, [az1, az2, az3], [z1, z2, z3]


# ----------------------------------------------------------------------------
# Deterministic parameter init (Xavier uniform, like torch.nn.init.xavier_uniform_)
# ----------------------------------------------------------------------------
def xavier_uniform(key, fan_in, fan_out):
    bound = (6.0 / (fan_in + fan_out)) ** 0.5
    return jax.random.uniform(
        key, (fan_in, fan_out), dtype=jnp.float32, minval=-bound, maxval=bound
    )


if __name__ == "__main__":
    # Small, module-consistent shapes (N chosen lane-dense = 128):
    #   N nodes = 128, n_input = 32, gae_n_enc_1 = 32, gae_n_enc_2 = 16, gae_n_enc_3 = 16
    N = 128
    n_input = 32
    gae_n_enc_1 = 32
    gae_n_enc_2 = 16
    gae_n_enc_3 = 16

    key = jax.random.PRNGKey(0)
    k_x, k_a, k_w1, k_w2, k_w3 = jax.random.split(key, 5)

    x = jax.random.normal(k_x, (N, n_input), dtype=jnp.float32)

    # Symmetric, row-normalized dense adjacency (stand-in for the sparse adj).
    a_raw = (jax.random.uniform(k_a, (N, N)) > 0.8).astype(jnp.float32)
    a_sym = jnp.maximum(a_raw, a_raw.T) + jnp.eye(N, dtype=jnp.float32)
    adj = a_sym / jnp.sum(a_sym, axis=1, keepdims=True)

    params = {
        "w1": xavier_uniform(k_w1, n_input, gae_n_enc_1),
        "w2": xavier_uniform(k_w2, gae_n_enc_1, gae_n_enc_2),
        "w3": xavier_uniform(k_w3, gae_n_enc_2, gae_n_enc_3),
    }

    fwd = jax.jit(lambda x_, a_: igae_encoder_forward(x_, a_, params))
    z_igae, z_igae_adj, az_list, z_list = fwd(x, adj)
    jax.block_until_ready((z_igae, z_igae_adj, az_list, z_list))

    # Shape checks.
    assert z_igae.shape == (N, gae_n_enc_3)
    assert z_igae_adj.shape == (N, N)
    assert az_list[0].shape == (N, gae_n_enc_1)
    assert az_list[1].shape == (N, gae_n_enc_2)
    assert az_list[2].shape == (N, gae_n_enc_3)
    assert z_list[0].shape == (N, gae_n_enc_1)
    assert z_list[1].shape == (N, gae_n_enc_2)
    assert z_list[2].shape == (N, gae_n_enc_3)

    # Numerical check vs. a pure-JAX reference (loose tol: XLA default matmul
    # precision vs. in-kernel f32 MXU accumulation may differ slightly).
    r_z, r_g, r_az, r_zs = jax.jit(
        lambda x_, a_: _reference_forward(x_, a_, params))(x, adj)
    tol = dict(rtol=1e-2, atol=1e-2)
    assert jnp.allclose(z_igae, r_z, **tol)
    assert jnp.allclose(z_igae_adj, r_g, **tol)
    for a, b in zip(az_list, r_az):
        assert jnp.allclose(a, b, **tol)
    for a, b in zip(z_list, r_zs):
        assert jnp.allclose(a, b, **tol)

    print("KERNEL_OK")
</pallas_src>

<mosaic_0001>
module attributes {stable_mosaic.version = 11 : i64} {
  func.func @_igae_fused_kernel(%arg0: i32, %arg1: memref<128x32xf32, #tpu.memory_space<vmem>>, %arg2: memref<128x128xf32, #tpu.memory_space<vmem>>, %arg3: memref<32x32xf32, #tpu.memory_space<vmem>>, %arg4: memref<32x16xf32, #tpu.memory_space<vmem>>, %arg5: memref<16x16xf32, #tpu.memory_space<vmem>>, %arg6: memref<128x128xf32, #tpu.memory_space<vmem>>, %arg7: memref<128x128xf32, #tpu.memory_space<vmem>>) attributes {dimension_semantics = [#tpu.dimension_semantics<arbitrary>], iteration_bounds = array<i64: 1>, scalar_prefetch = 0 : i64, scratch_operands = 0 : i64, tpu.core_type = #tpu.core_type<tc>, window_params = [{pipeline_mode = #tpu.pipeline_mode<synchronous>, transform_indices = @transform_0, window_bounds = array<i64: 128, 32>}, {pipeline_mode = #tpu.pipeline_mode<synchronous>, transform_indices = @transform_1, window_bounds = array<i64: 128, 128>}, {pipeline_mode = #tpu.pipeline_mode<synchronous>, transform_indices = @transform_2, window_bounds = array<i64: 32, 32>}, {pipeline_mode = #tpu.pipeline_mode<synchronous>, transform_indices = @transform_3, window_bounds = array<i64: 32, 16>}, {pipeline_mode = #tpu.pipeline_mode<synchronous>, transform_indices = @transform_4, window_bounds = array<i64: 16, 16>}, {pipeline_mode = #tpu.pipeline_mode<synchronous>, transform_indices = @transform_5, window_bounds = array<i64: 128, 128>}, {pipeline_mode = #tpu.pipeline_mode<synchronous>, transform_indices = @transform_6, window_bounds = array<i64: 128, 128>}]} {
    %c0 = arith.constant 0 : index
    %c0_0 = arith.constant 0 : index
    %0 = vector.load %arg2[%c0, %c0_0] : memref<128x128xf32, #tpu.memory_space<vmem>>, vector<128x128xf32>
    %c0_1 = arith.constant 0 : index
    %c0_2 = arith.constant 0 : index
    %1 = vector.load %arg1[%c0_1, %c0_2] : memref<128x32xf32, #tpu.memory_space<vmem>>, vector<128x32xf32>
    %c0_3 = arith.constant 0 : index
    %c0_4 = arith.constant 0 : index
    %2 = vector.load %arg3[%c0_3, %c0_4] : memref<32x32xf32, #tpu.memory_space<vmem>>, vector<32x32xf32>
    %cst = arith.constant dense<0.000000e+00> : vector<128x32xf32>
    %3 = tpu.matmul %1, %2, %cst {dimension_numbers = #tpu.dot_dimension_numbers<[1], [0], [0], [1], [0, 0, 1, 1], [], []>} : vector<128x32xf32>, vector<32x32xf32>, vector<128x32xf32> -> vector<128x32xf32>
    %cst_5 = arith.constant 2.000000e-01 : f32
    %4 = vector.broadcast %cst_5 : f32 to vector<128x32xf32>
    %5 = arith.mulf %4, %3 : vector<128x32xf32>
    %6 = arith.maximumf %3, %5 : vector<128x32xf32>
    %cst_6 = arith.constant dense<0.000000e+00> : vector<128x32xf32>
    %7 = tpu.matmul %0, %6, %cst_6 {dimension_numbers = #tpu.dot_dimension_numbers<[1], [0], [0], [1], [0, 0, 1, 1], [], []>} : vector<128x128xf32>, vector<128x32xf32>, vector<128x32xf32> -> vector<128x32xf32>
    %cst_7 = arith.constant dense<0.000000e+00> : vector<128x32xf32>
    %8 = tpu.matmul %0, %7, %cst_7 {dimension_numbers = #tpu.dot_dimension_numbers<[1], [0], [0], [1], [0, 0, 1, 1], [], []>} : vector<128x128xf32>, vector<128x32xf32>, vector<128x32xf32> -> vector<128x32xf32>
    %c0_8 = arith.constant 0 : index
    %c0_9 = arith.constant 0 : index
    %9 = vector.load %arg4[%c0_8, %c0_9] : memref<32x16xf32, #tpu.memory_space<vmem>>, vector<32x16xf32>
    %cst_10 = arith.constant dense<0.000000e+00> : vector<128x16xf32>
    %10 = tpu.matmul %7, %9, %cst_10 {dimension_numbers = #tpu.dot_dimension_numbers<[1], [0], [0], [1], [0, 0, 1, 1], [], []>} : vector<128x32xf32>, vector<32x16xf32>, vector<128x16xf32> -> vector<128x16xf32>
    %cst_11 = arith.constant 2.000000e-01 : f32
    %11 = vector.broadcast %cst_11 : f32 to vector<128x16xf32>
    %12 = arith.mulf %11, %10 : vector<128x16xf32>
    %13 = arith.maximumf %10, %12 : vector<128x16xf32>
    %cst_12 = arith.constant dense<0.000000e+00> : vector<128x16xf32>
    %14 = tpu.matmul %0, %13, %cst_12 {dimension_numbers = #tpu.dot_dimension_numbers<[1], [0], [0], [1], [0, 0, 1, 1], [], []>} : vector<128x128xf32>, vector<128x16xf32>, vector<128x16xf32> -> vector<128x16xf32>
    %cst_13 = arith.constant dense<0.000000e+00> : vector<128x16xf32>
    %15 = tpu.matmul %0, %14, %cst_13 {dimension_numbers = #tpu.dot_dimension_numbers<[1], [0], [0], [1], [0, 0, 1, 1], [], []>} : vector<128x128xf32>, vector<128x16xf32>, vector<128x16xf32> -> vector<128x16xf32>
    %c0_14 = arith.constant 0 : index
    %c0_15 = arith.constant 0 : index
    %16 = vector.load %arg5[%c0_14, %c0_15] : memref<16x16xf32, #tpu.memory_space<vmem>>, vector<16x16xf32>
    %cst_16 = arith.constant dense<0.000000e+00> : vector<128x16xf32>
    %17 = tpu.matmul %14, %16, %cst_16 {dimension_numbers = #tpu.dot_dimension_numbers<[1], [0], [0], [1], [0, 0, 1, 1], [], []>} : vector<128x16xf32>, vector<16x16xf32>, vector<128x16xf32> -> vector<128x16xf32>
    %cst_17 = arith.constant dense<0.000000e+00> : vector<128x16xf32>
    %18 = tpu.matmul %0, %17, %cst_17 {dimension_numbers = #tpu.dot_dimension_numbers<[1], [0], [0], [1], [0, 0, 1, 1], [], []>} : vector<128x128xf32>, vector<128x16xf32>, vector<128x16xf32> -> vector<128x16xf32>
    %cst_18 = arith.constant dense<0.000000e+00> : vector<128x16xf32>
    %19 = tpu.matmul %0, %18, %cst_18 {dimension_numbers = #tpu.dot_dimension_numbers<[1], [0], [0], [1], [0, 0, 1, 1], [], []>} : vector<128x128xf32>, vector<128x16xf32>, vector<128x16xf32> -> vector<128x16xf32>
    %cst_19 = arith.constant dense<0.000000e+00> : vector<128x128xf32>
    %20 = tpu.matmul %18, %18, %cst_19 {dimension_numbers = #tpu.dot_dimension_numbers<[1], [1], [0], [0], [0, 0, 1, 0], [], []>} : vector<128x16xf32>, vector<128x16xf32>, vector<128x128xf32> -> vector<128x128xf32>
    %21 = arith.negf %20 : vector<128x128xf32>
    %22 = math.exp %21 : vector<128x128xf32>
    %cst_20 = arith.constant 1.000000e+00 : f32
    %23 = vector.broadcast %cst_20 : f32 to vector<128x128xf32>
    %24 = arith.addf %23, %22 : vector<128x128xf32>
    %25 = arith.divf %23, %24 : vector<128x128xf32>
    %c0_21 = arith.constant 0 : index
    %c0_22 = arith.constant 0 : index
    %26 = vector.load %arg7[%c0_21, %c0_22] : memref<128x128xf32, #tpu.memory_space<vmem>>, vector<128x128xf32>
    tpu.vector_store %arg7[%c0_21, %c0_22], %25 {strides = array<i32>} : memref<128x128xf32, #tpu.memory_space<vmem>>, vector<128x128xf32>,
    %27 = tpu.concatenate %7, %8, %14, %15, %18, %19 in 1 : vector<128x32xf32>, vector<128x32xf32>, vector<128x16xf32>, vector<128x16xf32>, vector<128x16xf32>, vector<128x16xf32> -> vector<128x128xf32>
    %c0_23 = arith.constant 0 : index
    %c0_24 = arith.constant 0 : index
    %28 = vector.load %arg6[%c0_23, %c0_24] : memref<128x128xf32, #tpu.memory_space<vmem>>, vector<128x128xf32>
    tpu.vector_store %arg6[%c0_23, %c0_24], %27 {strides = array<i32>} : memref<128x128xf32, #tpu.memory_space<vmem>>, vector<128x128xf32>,
    return
  }
  func.func @transform_0(%arg0: i32) -> (i32, i32) {
    %c0_i32 = arith.constant 0 : i32
    %c0_i32_0 = arith.constant 0 : i32
    %c0_i32_1 = arith.constant 0 : i32
    return %c0_i32, %c0_i32_0 : i32, i32
  }
  func.func @transform_1(%arg0: i32) -> (i32, i32) {
    %c0_i32 = arith.constant 0 : i32
    %c0_i32_0 = arith.constant 0 : i32
    %c0_i32_1 = arith.constant 0 : i32
    return %c0_i32, %c0_i32_0 : i32, i32
  }
  func.func @transform_2(%arg0: i32) -> (i32, i32) {
    %c0_i32 = arith.constant 0 : i32
    %c0_i32_0 = arith.constant 0 : i32
    %c0_i32_1 = arith.constant 0 : i32
    return %c0_i32, %c0_i32_0 : i32, i32
  }
  func.func @transform_3(%arg0: i32) -> (i32, i32) {
    %c0_i32 = arith.constant 0 : i32
    %c0_i32_0 = arith.constant 0 : i32
    %c0_i32_1 = arith.constant 0 : i32
    return %c0_i32, %c0_i32_0 : i32, i32
  }
  func.func @transform_4(%arg0: i32) -> (i32, i32) {
    %c0_i32 = arith.constant 0 : i32
    %c0_i32_0 = arith.constant 0 : i32
    %c0_i32_1 = arith.constant 0 : i32
    return %c0_i32, %c0_i32_0 : i32, i32
  }
  func.func @transform_5(%arg0: i32) -> (i32, i32) {
    %c0_i32 = arith.constant 0 : i32
    %c0_i32_0 = arith.constant 0 : i32
    %c0_i32_1 = arith.constant 0 : i32
    return %c0_i32, %c0_i32_0 : i32, i32
  }
  func.func @transform_6(%arg0: i32) -> (i32, i32) {
    %c0_i32 = arith.constant 0 : i32
    %c0_i32_0 = arith.constant 0 : i32
    %c0_i32_1 = arith.constant 0 : i32
    return %c0_i32, %c0_i32_0 : i32, i32
  }
}

</mosaic_0001>

<llo_original>
// kernel: _lambda_.1
$region0: #{_lambda_.1}
  #allocation0 [shape = 'u32[]', space=smem, size = 0x4, offset = 0x4, fixed_abs, tag = 'smem constant byte address 0x4 - core index']
  #allocation1 [shape = 'u32[72,128]{1,0:T(1,128)}', space=vmem, size = 0x9000, scoped, tag = 'internal scratch']
  %s0 = inlined_call_operand.vmem [shape: f32[128,32], index: 0, kind: input, shape index: {}]
  %s1 = inlined_call_operand.vmem [shape: f32[128,128], index: 1, kind: input, shape index: {}]
  %s2 = inlined_call_operand.vmem [shape: f32[32,32], index: 2, kind: input, shape index: {}]
  %s3 = inlined_call_operand.hbm [shape: f32[32,16], index: 3, kind: input, shape index: {}]
  %s4 = inlined_call_operand.hbm [shape: f32[16,16], index: 4, kind: input, shape index: {}]
  %s5 = inlined_call_operand.vmem [shape: f32[128,128], index: 5, kind: output, shape index: {0}]
  %s6 = inlined_call_operand.hbm [shape: f32[128,128], index: 6, kind: output, shape index: {1}]
  %7 = xla_tuple %s5, %s6
  %s8 = sld [smem:[#allocation0]]
  $region46: #{_lambda_.1} parent=0
    _
  %s10 = ssub.s32 1, %s8
  %s11 = scalar_select 0, %s10, %s8
  $region1: #{_lambda_.1} parent=0
    #allocation2 [shape = 'u8[16384]{0}', space=vmem, size = 0x4000, scoped, tag = 'input window, operand 3, single buffered']
    #allocation3 [shape = 's32[1]{0}', space=sflag, size = 0x4, scoped, tag = 'scoped memory for _lambda_.1']
    #allocation4 [shape = 's32[1]{0}', space=sflag, size = 0x4, scoped, tag = 'scoped memory for _lambda_.1']
    #allocation5 [shape = 'u8[8192]{0}', space=vmem, size = 0x2000, scoped, tag = 'input window, operand 4, single buffered']
    #allocation6 [shape = 's32[1]{0}', space=sflag, size = 0x4, scoped, tag = 'scoped memory for _lambda_.1']
    #allocation7 [shape = 'u8[65536]{0}', space=vmem, size = 0x10000, scoped, tag = 'output window, operand 1, single buffered']
    %12 = vsyncpa [#allocation3], 0
    %13 = vsyncpa [#allocation6], 0
    %14 = vsyncpa [#allocation4], 0
    // Predicated region
    $region2: #{_lambda_.1} parent=1 // pred_check
      _
    $region3: #{_lambda_.1} parent=1 // pred_check_branch
      %16 = sbr.rel (0) target = $region5
    $region4: #{_lambda_.1} parent=1 // pred_region
      _
    $region5: #{_lambda_.1} parent=1 // pred_fallthru
      _
    // Predicated region
    $region6: #{_lambda_.1} parent=1 // pred_check
      _
    $region7: #{_lambda_.1} parent=1 // pred_check_branch
      %18 = sbr.rel (0) target = $region9
    $region8: #{_lambda_.1} parent=1 // pred_region
      _
    $region9: #{_lambda_.1} parent=1 // pred_fallthru
      _
    // Predicated region
    $region10: #{_lambda_.1} parent=1 // pred_check
      _
    $region11: #{_lambda_.1} parent=1 // pred_check_branch
      %20 = sbr.rel (0) target = $region13
    $region12: #{_lambda_.1} parent=1 // pred_region
      _
    $region13: #{_lambda_.1} parent=1 // pred_fallthru
      _
    // Predicated region
    $region14: #{_lambda_.1} parent=1 // pred_check
      _
    $region15: #{_lambda_.1} parent=1 // pred_check_branch
      %22 = sbr.rel (0) target = $region17
    $region16: #{_lambda_.1} parent=1 // pred_region
      %24 = vsyncadd [#allocation3], 0
      %s25 = sshll.u32 %s3, 4
      %s26 = int_to_ptr.hbm [resolvable:$true] %s25
      %s27 = sshll.u32 [#allocation2], 4
      %s28 = int_to_ptr.vmem [resolvable:$true] %s27
      %33 = dma.hbm_to_vmem [thread:$0]  %s26, 512, %s28, [#allocation3], 128, 128, 8
    $region17: #{_lambda_.1} parent=1 // pred_fallthru
      _
    // Predicated region
    $region18: #{_lambda_.1} parent=1 // pred_check
      _
    $region19: #{_lambda_.1} parent=1 // pred_check_branch
      %35 = sbr.rel (0) target = $region21
    $region20: #{_lambda_.1} parent=1 // pred_region
      %37 = vsyncadd [#allocation6], 0
      %s38 = sshll.u32 %s4, 4
      %s39 = int_to_ptr.hbm [resolvable:$true] %s38
      %s40 = sshll.u32 [#allocation5], 4
      %s41 = int_to_ptr.vmem [resolvable:$true] %s40
      %46 = dma.hbm_to_vmem [thread:$0]  %s39, 256, %s41, [#allocation6], 128, 128, 8
    $region21: #{_lambda_.1} parent=1 // pred_fallthru
      _
    // Predicated region
    $region22: #{_lambda_.1} parent=1 // pred_check
      _
    $region23: #{_lambda_.1} parent=1 // pred_check_branch
      %48 = sbr.rel (0) target = $region25
    $region24: #{_lambda_.1} parent=1 // pred_region
      %50 = dma.done [#allocation3], 512
    $region25: #{_lambda_.1} parent=1 // pred_fallthru
      _
    // Predicated region
    $region26: #{_lambda_.1} parent=1 // pred_check
      _
    $region27: #{_lambda_.1} parent=1 // pred_check_branch
      %52 = sbr.rel (0) target = $region29
    $region28: #{_lambda_.1} parent=1 // pred_region
      %54 = dma.done [#allocation6], 256
    $region29: #{_lambda_.1} parent=1 // pred_fallthru
      _
    %v55 = vld [vmem:[%s1] sm:$0xff]
    %v56 = vld [vmem:[%s1 + $0x8] sm:$0xff]
    %v57 = vld [vmem:[%s1 + $0x10] sm:$0xff]
    %v58 = vld [vmem:[%s1 + $0x18] sm:$0xff]
    %v59 = vld [vmem:[%s1 + $0x20] sm:$0xff]
    %v60 = vld [vmem:[%s1 + $0x28] sm:$0xff]
    %v61 = vld [vmem:[%s1 + $0x30] sm:$0xff]
    %v62 = vld [vmem:[%s1 + $0x38] sm:$0xff]
    %v63 = vld [vmem:[%s1 + $0x40] sm:$0xff]
    %v64 = vld [vmem:[%s1 + $0x48] sm:$0xff]
    %v65 = vld [vmem:[%s1 + $0x50] sm:$0xff]
    %v66 = vld [vmem:[%s1 + $0x58] sm:$0xff]
    %v67 = vld [vmem:[%s1 + $0x60] sm:$0xff]
    %v68 = vld [vmem:[%s1 + $0x68] sm:$0xff]
    %v69 = vld [vmem:[%s1 + $0x70] sm:$0xff]
    %v70 = vld [vmem:[%s1 + $0x78] sm:$0xff]
    %v71 = vld [vmem:[%s0] sm:$0xff]
    %v72 = vld [vmem:[%s0 + $0x8] sm:$0xff]
    %v73 = vld [vmem:[%s0 + $0x10] sm:$0xff]
    %v74 = vld [vmem:[%s0 + $0x18] sm:$0xff]
    %v75 = vld [vmem:[%s0 + $0x20] sm:$0xff]
    %v76 = vld [vmem:[%s0 + $0x28] sm:$0xff]
    %v77 = vld [vmem:[%s0 + $0x30] sm:$0xff]
    %v78 = vld [vmem:[%s0 + $0x38] sm:$0xff]
    %v79 = vld [vmem:[%s0 + $0x40] sm:$0xff]
    %v80 = vld [vmem:[%s0 + $0x48] sm:$0xff]
    %v81 = vld [vmem:[%s0 + $0x50] sm:$0xff]
    %v82 = vld [vmem:[%s0 + $0x58] sm:$0xff]
    %v83 = vld [vmem:[%s0 + $0x60] sm:$0xff]
    %v84 = vld [vmem:[%s0 + $0x68] sm:$0xff]
    %v85 = vld [vmem:[%s0 + $0x70] sm:$0xff]
    %v86 = vld [vmem:[%s0 + $0x78] sm:$0xff]
    %v87 = vld [vmem:[%s2] sm:$0xff]
    %v88 = vld [vmem:[%s2 + $0x8] sm:$0xff]
    %v89 = vld [vmem:[%s2 + $0x10] sm:$0xff]
    %v90 = vld [vmem:[%s2 + $0x18] sm:$0xff]
    %vm91 = vcmask 261120
    %v93 = vsel %vm91, %v71, 0
    %v96 = vsel %vm91, %v72, 0
    %v99 = vsel %vm91, %v73, 0
    %v102 = vsel %vm91, %v74, 0
    %v105 = vsel %vm91, %v75, 0
    %v108 = vsel %vm91, %v76, 0
    %v111 = vsel %vm91, %v77, 0
    %v114 = vsel %vm91, %v78, 0
    %v117 = vsel %vm91, %v79, 0
    %v120 = vsel %vm91, %v80, 0
    %v123 = vsel %vm91, %v81, 0
    %v126 = vsel %vm91, %v82, 0
    %v129 = vsel %vm91, %v83, 0
    %v132 = vsel %vm91, %v84, 0
    %v135 = vsel %vm91, %v85, 0
    %v138 = vsel %vm91, %v86, 0
    %140 = vmatpush.msra.mxu0 0.0
    %141 = vmatpush.msra.mxu0 0.0
    %142 = vmatpush.msra.mxu0 0.0
    %143 = vmatpush.msra.mxu0 0.0
    %144 = vmatpush.msra.mxu0 0.0
    %145 = vmatpush.msra.mxu0 0.0
    %146 = vmatpush.msra.mxu0 0.0
    %147 = vmatpush.msra.mxu0 0.0
    %148 = vmatpush.msra.mxu0 0.0
    %149 = vmatpush.msra.mxu0 0.0
    %150 = vmatpush.msra.mxu0 0.0
    %151 = vmatpush.msra.mxu0 0.0
    %152 = vmatpush.msra.mxu0 %v90
    %153 = vmatpush.msra.mxu0 %v89
    %154 = vmatpush.msra.mxu0 %v88
    %155 = vmatpush.msra.mxu0 %v87
    %156 = vmatmul.f32.gmra.mxu0 %v93
    %v157 = vpop.f32.mrf.mxu0
    %v158 = vadd.f32 0.0, %v157
    %159 = vmatmul.f32.gmra.mxu0 %v96
    %v160 = vpop.f32.mrf.mxu0
    %v161 = vadd.f32 0.0, %v160
    %162 = vmatmul.f32.gmra.mxu0 %v99
    %v163 = vpop.f32.mrf.mxu0
    %v164 = vadd.f32 0.0, %v163
    %165 = vmatmul.f32.gmra.mxu0 %v102
    %v166 = vpop.f32.mrf.mxu0
    %v167 = vadd.f32 0.0, %v166
    %168 = vmatmul.f32.gmra.mxu0 %v105
    %v169 = vpop.f32.mrf.mxu0
    %v170 = vadd.f32 0.0, %v169
    %171 = vmatmul.f32.gmra.mxu0 %v108
    %v172 = vpop.f32.mrf.mxu0
    %v173 = vadd.f32 0.0, %v172
    %174 = vmatmul.f32.gmra.mxu0 %v111
    %v175 = vpop.f32.mrf.mxu0
    %v176 = vadd.f32 0.0, %v175
    %177 = vmatmul.f32.gmra.mxu0 %v114
    %v178 = vpop.f32.mrf.mxu0
    %v179 = vadd.f32 0.0, %v178
    %180 = vmatmul.f32.gmra.mxu0 %v117
    %v181 = vpop.f32.mrf.mxu0
    %v182 = vadd.f32 0.0, %v181
    %183 = vmatmul.f32.gmra.mxu0 %v120
    %v184 = vpop.f32.mrf.mxu0
    %v185 = vadd.f32 0.0, %v184
    %186 = vmatmul.f32.gmra.mxu0 %v123
    %v187 = vpop.f32.mrf.mxu0
    %v188 = vadd.f32 0.0, %v187
    %189 = vmatmul.f32.gmra.mxu0 %v126
    %v190 = vpop.f32.mrf.mxu0
    %v191 = vadd.f32 0.0, %v190
    %192 = vmatmul.f32.gmra.mxu0 %v129
    %v193 = vpop.f32.mrf.mxu0
    %v194 = vadd.f32 0.0, %v193
    %195 = vmatmul.f32.gmra.mxu0 %v132
    %v196 = vpop.f32.mrf.mxu0
    %v197 = vadd.f32 0.0, %v196
    %198 = vmatmul.f32.gmra.mxu0 %v135
    %v199 = vpop.f32.mrf.mxu0
    %v200 = vadd.f32 0.0, %v199
    %201 = vmatmul.f32.gmra.mxu0 %v138
    %v202 = vpop.f32.mrf.mxu0
    %v203 = vadd.f32 0.0, %v202
    %204 = vdwg.mxu0
    %v205 = vmul.f32 %v158, 0.2
    %v206 = vmul.f32 %v161, 0.2
    %v207 = vmul.f32 %v164, 0.2
    %v208 = vmul.f32 %v167, 0.2
    %v209 = vmul.f32 %v170, 0.2
    %v210 = vmul.f32 %v173, 0.2
    %v211 = vmul.f32 %v176, 0.2
    %v212 = vmul.f32 %v179, 0.2
    %v213 = vmul.f32 %v182, 0.2
    %v214 = vmul.f32 %v185, 0.2
    %v215 = vmul.f32 %v188, 0.2
    %v216 = vmul.f32 %v191, 0.2
    %v217 = vmul.f32 %v194, 0.2
    %v218 = vmul.f32 %v197, 0.2
    %v219 = vmul.f32 %v200, 0.2
    %v220 = vmul.f32 %v203, 0.2
    %v221 = vmax.f32 %v158, %v205
    %v222 = vmax.f32 %v161, %v206
    %v223 = vmax.f32 %v164, %v207
    %v224 = vmax.f32 %v167, %v208
    %v225 = vmax.f32 %v170, %v209
    %v226 = vmax.f32 %v173, %v210
    %v227 = vmax.f32 %v176, %v211
    %v228 = vmax.f32 %v179, %v212
    %v229 = vmax.f32 %v182, %v213
    %v230 = vmax.f32 %v185, %v214
    %v231 = vmax.f32 %v188, %v215
    %v232 = vmax.f32 %v191, %v216
    %v233 = vmax.f32 %v194, %v217
    %v234 = vmax.f32 %v197, %v218
    %v235 = vmax.f32 %v200, %v219
    %v236 = vmax.f32 %v203, %v220
    %237 = vmatpush.msra.mxu0 %v236
    %238 = vmatpush.msra.mxu0 %v235
    %239 = vmatpush.msra.mxu0 %v234
    %240 = vmatpush.msra.mxu0 %v233
    %241 = vmatpush.msra.mxu0 %v232
    %242 = vmatpush.msra.mxu0 %v231
    %243 = vmatpush.msra.mxu0 %v230
    %244 = vmatpush.msra.mxu0 %v229
    %245 = vmatpush.msra.mxu0 %v228
    %246 = vmatpush.msra.mxu0 %v227
    %247 = vmatpush.msra.mxu0 %v226
    %248 = vmatpush.msra.mxu0 %v225
    %249 = vmatpush.msra.mxu0 %v224
    %250 = vmatpush.msra.mxu0 %v223
    %251 = vmatpush.msra.mxu0 %v222
    %252 = vmatpush.msra.mxu0 %v221
    %253 = vmatmul.f32.gmra.mxu0 %v55
    %v254 = vpop.f32.mrf.mxu0
    %v255 = vadd.f32 0.0, %v254
    %256 = vmatmul.f32.gmra.mxu0 %v56
    %v257 = vpop.f32.mrf.mxu0
    %v258 = vadd.f32 0.0, %v257
    %259 = vmatmul.f32.gmra.mxu0 %v57
    %v260 = vpop.f32.mrf.mxu0
    %v261 = vadd.f32 0.0, %v260
    %262 = vmatmul.f32.gmra.mxu0 %v58
    %v263 = vpop.f32.mrf.mxu0
    %v264 = vadd.f32 0.0, %v263
    %265 = vmatmul.f32.gmra.mxu0 %v59
    %v266 = vpop.f32.mrf.mxu0
    %v267 = vadd.f32 0.0, %v266
    %268 = vmatmul.f32.gmra.mxu0 %v60
    %v269 = vpop.f32.mrf.mxu0
    %v270 = vadd.f32 0.0, %v269
    %271 = vmatmul.f32.gmra.mxu0 %v61
    %v272 = vpop.f32.mrf.mxu0
    %v273 = vadd.f32 0.0, %v272
    %274 = vmatmul.f32.gmra.mxu0 %v62
    %v275 = vpop.f32.mrf.mxu0
    %v276 = vadd.f32 0.0, %v275
    %277 = vmatmul.f32.gmra.mxu0 %v63
    %v278 = vpop.f32.mrf.mxu0
    %v279 = vadd.f32 0.0, %v278
    %280 = vmatmul.f32.gmra.mxu0 %v64
    %v281 = vpop.f32.mrf.mxu0
    %v282 = vadd.f32 0.0, %v281
    %283 = vmatmul.f32.gmra.mxu0 %v65
    %v284 = vpop.f32.mrf.mxu0
    %v285 = vadd.f32 0.0, %v284
    %286 = vmatmul.f32.gmra.mxu0 %v66
    %v287 = vpop.f32.mrf.mxu0
    %v288 = vadd.f32 0.0, %v287
    %289 = vmatmul.f32.gmra.mxu0 %v67
    %v290 = vpop.f32.mrf.mxu0
    %v291 = vadd.f32 0.0, %v290
    %292 = vmatmul.f32.gmra.mxu0 %v68
    %v293 = vpop.f32.mrf.mxu0
    %v294 = vadd.f32 0.0, %v293
    %295 = vmatmul.f32.gmra.mxu0 %v69
    %v296 = vpop.f32.mrf.mxu0
    %v297 = vadd.f32 0.0, %v296
    %298 = vmatmul.f32.gmra.mxu0 %v70
    %v299 = vpop.f32.mrf.mxu0
    %v300 = vadd.f32 0.0, %v299
    %301 = vdwg.mxu0
    %302 = vmatpush.msra.mxu0 %v300
    %303 = vmatpush.msra.mxu0 %v297
    %304 = vmatpush.msra.mxu0 %v294
    %305 = vmatpush.msra.mxu0 %v291
    %306 = vmatpush.msra.mxu0 %v288
    %307 = vmatpush.msra.mxu0 %v285
    %308 = vmatpush.msra.mxu0 %v282
    %309 = vmatpush.msra.mxu0 %v279
    %310 = vmatpush.msra.mxu0 %v276
    %311 = vmatpush.msra.mxu0 %v273
    %312 = vmatpush.msra.mxu0 %v270
    %313 = vmatpush.msra.mxu0 %v267
    %314 = vmatpush.msra.mxu0 %v264
    %315 = vmatpush.msra.mxu0 %v261
    %316 = vmatpush.msra.mxu0 %v258
    %317 = vmatpush.msra.mxu0 %v255
    %318 = vmatmul.f32.gmra.mxu0 %v55
    %v319 = vpop.f32.mrf.mxu0
    %v320 = vadd.f32 0.0, %v319
    %321 = vmatmul.f32.gmra.mxu0 %v56
    %v322 = vpop.f32.mrf.mxu0
    %v323 = vadd.f32 0.0, %v322
    %324 = vmatmul.f32.gmra.mxu0 %v57
    %v325 = vpop.f32.mrf.mxu0
    %v326 = vadd.f32 0.0, %v325
    %327 = vmatmul.f32.gmra.mxu0 %v58
    %v328 = vpop.f32.mrf.mxu0
    %v329 = vadd.f32 0.0, %v328
    %330 = vmatmul.f32.gmra.mxu0 %v59
    %v331 = vpop.f32.mrf.mxu0
    %v332 = vadd.f32 0.0, %v331
    %333 = vmatmul.f32.gmra.mxu0 %v60
    %v334 = vpop.f32.mrf.mxu0
    %v335 = vadd.f32 0.0, %v334
    %336 = vmatmul.f32.gmra.mxu0 %v61
    %v337 = vpop.f32.mrf.mxu0
    %v338 = vadd.f32 0.0, %v337
    %339 = vmatmul.f32.gmra.mxu0 %v62
    %v340 = vpop.f32.mrf.mxu0
    %v341 = vadd.f32 0.0, %v340
    %342 = vmatmul.f32.gmra.mxu0 %v63
    %v343 = vpop.f32.mrf.mxu0
    %v344 = vadd.f32 0.0, %v343
    %345 = vmatmul.f32.gmra.mxu0 %v64
    %v346 = vpop.f32.mrf.mxu0
    %v347 = vadd.f32 0.0, %v346
    %348 = vmatmul.f32.gmra.mxu0 %v65
    %v349 = vpop.f32.mrf.mxu0
    %v350 = vadd.f32 0.0, %v349
    %351 = vmatmul.f32.gmra.mxu0 %v66
    %v352 = vpop.f32.mrf.mxu0
    %v353 = vadd.f32 0.0, %v352
    %354 = vmatmul.f32.gmra.mxu0 %v67
    %v355 = vpop.f32.mrf.mxu0
    %v356 = vadd.f32 0.0, %v355
    %357 = vmatmul.f32.gmra.mxu0 %v68
    %v358 = vpop.f32.mrf.mxu0
    %v359 = vadd.f32 0.0, %v358
    %360 = vmatmul.f32.gmra.mxu0 %v69
    %v361 = vpop.f32.mrf.mxu0
    %v362 = vadd.f32 0.0, %v361
    %363 = vmatmul.f32.gmra.mxu0 %v70
    %v364 = vpop.f32.mrf.mxu0
    %v365 = vadd.f32 0.0, %v364
    %366 = vdwg.mxu0
    %v367 = vld [vmem:[#allocation2] sm:$0xff]
    %v368 = vld [vmem:[#allocation2 + $0x8] sm:$0xff]
    %v369 = vld [vmem:[#allocation2 + $0x10] sm:$0xff]
    %v370 = vld [vmem:[#allocation2 + $0x18] sm:$0xff]
    %v372 = vsel %vm91, %v255, 0
    %v375 = vsel %vm91, %v258, 0
    %v378 = vsel %vm91, %v261, 0
    %v381 = vsel %vm91, %v264, 0
    %v384 = vsel %vm91, %v267, 0
    %v387 = vsel %vm91, %v270, 0
    %v390 = vsel %vm91, %v273, 0
    %v393 = vsel %vm91, %v276, 0
    %v396 = vsel %vm91, %v279, 0
    %v399 = vsel %vm91, %v282, 0
    %v402 = vsel %vm91, %v285, 0
    %v405 = vsel %vm91, %v288, 0
    %v408 = vsel %vm91, %v291, 0
    %v411 = vsel %vm91, %v294, 0
    %v414 = vsel %vm91, %v297, 0
    %v417 = vsel %vm91, %v300, 0
    %419 = vmatpush.msra.mxu0 0.0
    %420 = vmatpush.msra.mxu0 0.0
    %421 = vmatpush.msra.mxu0 0.0
    %422 = vmatpush.msra.mxu0 0.0
    %423 = vmatpush.msra.mxu0 0.0
    %424 = vmatpush.msra.mxu0 0.0
    %425 = vmatpush.msra.mxu0 0.0
    %426 = vmatpush.msra.mxu0 0.0
    %427 = vmatpush.msra.mxu0 0.0
    %428 = vmatpush.msra.mxu0 0.0
    %429 = vmatpush.msra.mxu0 0.0
    %430 = vmatpush.msra.mxu0 0.0
    %431 = vmatpush.msra.mxu0 %v370
    %432 = vmatpush.msra.mxu0 %v369
    %433 = vmatpush.msra.mxu0 %v368
    %434 = vmatpush.msra.mxu0 %v367
    %435 = vmatmul.f32.gmra.mxu0 %v372
    %v436 = vpop.f32.mrf.mxu0
    %v437 = vadd.f32 0.0, %v436
    %438 = vmatmul.f32.gmra.mxu0 %v375
    %v439 = vpop.f32.mrf.mxu0
    %v440 = vadd.f32 0.0, %v439
    %441 = vmatmul.f32.gmra.mxu0 %v378
    %v442 = vpop.f32.mrf.mxu0
    %v443 = vadd.f32 0.0, %v442
    %444 = vmatmul.f32.gmra.mxu0 %v381
    %v445 = vpop.f32.mrf.mxu0
    %v446 = vadd.f32 0.0, %v445
    %447 = vmatmul.f32.gmra.mxu0 %v384
    %v448 = vpop.f32.mrf.mxu0
    %v449 = vadd.f32 0.0, %v448
    %450 = vmatmul.f32.gmra.mxu0 %v387
    %v451 = vpop.f32.mrf.mxu0
    %v452 = vadd.f32 0.0, %v451
    %453 = vmatmul.f32.gmra.mxu0 %v390
    %v454 = vpop.f32.mrf.mxu0
    %v455 = vadd.f32 0.0, %v454
    %456 = vmatmul.f32.gmra.mxu0 %v393
    %v457 = vpop.f32.mrf.mxu0
    %v458 = vadd.f32 0.0, %v457
    %459 = vmatmul.f32.gmra.mxu0 %v396
    %v460 = vpop.f32.mrf.mxu0
    %v461 = vadd.f32 0.0, %v460
    %462 = vmatmul.f32.gmra.mxu0 %v399
    %v463 = vpop.f32.mrf.mxu0
    %v464 = vadd.f32 0.0, %v463
    %465 = vmatmul.f32.gmra.mxu0 %v402
    %v466 = vpop.f32.mrf.mxu0
    %v467 = vadd.f32 0.0, %v466
    %468 = vmatmul.f32.gmra.mxu0 %v405
    %v469 = vpop.f32.mrf.mxu0
    %v470 = vadd.f32 0.0, %v469
    %471 = vmatmul.f32.gmra.mxu0 %v408
    %v472 = vpop.f32.mrf.mxu0
    %v473 = vadd.f32 0.0, %v472
    %474 = vmatmul.f32.gmra.mxu0 %v411
    %v475 = vpop.f32.mrf.mxu0
    %v476 = vadd.f32 0.0, %v475
    %477 = vmatmul.f32.gmra.mxu0 %v414
    %v478 = vpop.f32.mrf.mxu0
    %v479 = vadd.f32 0.0, %v478
    %480 = vmatmul.f32.gmra.mxu0 %v417
    %v481 = vpop.f32.mrf.mxu0
    %v482 = vadd.f32 0.0, %v481
    %483 = vdwg.mxu0
    %v484 = vmul.f32 %v437, 0.2
    %v485 = vmul.f32 %v440, 0.2
    %v486 = vmul.f32 %v443, 0.2
    %v487 = vmul.f32 %v446, 0.2
    %v488 = vmul.f32 %v449, 0.2
    %v489 = vmul.f32 %v452, 0.2
    %v490 = vmul.f32 %v455, 0.2
    %v491 = vmul.f32 %v458, 0.2
    %v492 = vmul.f32 %v461, 0.2
    %v493 = vmul.f32 %v464, 0.2
    %v494 = vmul.f32 %v467, 0.2
    %v495 = vmul.f32 %v470, 0.2
    %v496 = vmul.f32 %v473, 0.2
    %v497 = vmul.f32 %v476, 0.2
    %v498 = vmul.f32 %v479, 0.2
    %v499 = vmul.f32 %v482, 0.2
    %v500 = vmax.f32 %v437, %v484
    %v501 = vmax.f32 %v440, %v485
    %v502 = vmax.f32 %v443, %v486
    %v503 = vmax.f32 %v446, %v487
    %v504 = vmax.f32 %v449, %v488
    %v505 = vmax.f32 %v452, %v489
    %v506 = vmax.f32 %v455, %v490
    %v507 = vmax.f32 %v458, %v491
    %v508 = vmax.f32 %v461, %v492
    %v509 = vmax.f32 %v464, %v493
    %v510 = vmax.f32 %v467, %v494
    %v511 = vmax.f32 %v470, %v495
    %v512 = vmax.f32 %v473, %v496
    %v513 = vmax.f32 %v476, %v497
    %v514 = vmax.f32 %v479, %v498
    %v515 = vmax.f32 %v482, %v499
    %516 = vmatpush.msra.mxu0 %v515
    %517 = vmatpush.msra.mxu0 %v514
    %518 = vmatpush.msra.mxu0 %v513
    %519 = vmatpush.msra.mxu0 %v512
    %520 = vmatpush.msra.mxu0 %v511
    %521 = vmatpush.msra.mxu0 %v510
    %522 = vmatpush.msra.mxu0 %v509
    %523 = vmatpush.msra.mxu0 %v508
    %524 = vmatpush.msra.mxu0 %v507
    %525 = vmatpush.msra.mxu0 %v506
    %526 = vmatpush.msra.mxu0 %v505
    %527 = vmatpush.msra.mxu0 %v504
    %528 = vmatpush.msra.mxu0 %v503
    %529 = vmatpush.msra.mxu0 %v502
    %530 = vmatpush.msra.mxu0 %v501
    %531 = vmatpush.msra.mxu0 %v500
    %532 = vmatmul.f32.gmra.mxu0 %v55
    %v533 = vpop.f32.mrf.mxu0
    %v534 = vadd.f32 0.0, %v533
    %535 = vmatmul.f32.gmra.mxu0 %v56
    %v536 = vpop.f32.mrf.mxu0
    %v537 = vadd.f32 0.0, %v536
    %538 = vmatmul.f32.gmra.mxu0 %v57
    %v539 = vpop.f32.mrf.mxu0
    %v540 = vadd.f32 0.0, %v539
    %541 = vmatmul.f32.gmra.mxu0 %v58
    %v542 = vpop.f32.mrf.mxu0
    %v543 = vadd.f32 0.0, %v542
    %544 = vmatmul.f32.gmra.mxu0 %v59
    %v545 = vpop.f32.mrf.mxu0
    %v546 = vadd.f32 0.0, %v545
    %547 = vmatmul.f32.gmra.mxu0 %v60
    %v548 = vpop.f32.mrf.mxu0
    %v549 = vadd.f32 0.0, %v548
    %550 = vmatmul.f32.gmra.mxu0 %v61
    %v551 = vpop.f32.mrf.mxu0
    %v552 = vadd.f32 0.0, %v551
    %553 = vmatmul.f32.gmra.mxu0 %v62
    %v554 = vpop.f32.mrf.mxu0
    %v555 = vadd.f32 0.0, %v554
    %556 = vmatmul.f32.gmra.mxu0 %v63
    %v557 = vpop.f32.mrf.mxu0
    %v558 = vadd.f32 0.0, %v557
    %559 = vmatmul.f32.gmra.mxu0 %v64
    %v560 = vpop.f32.mrf.mxu0
    %v561 = vadd.f32 0.0, %v560
    %562 = vmatmul.f32.gmra.mxu0 %v65
    %v563 = vpop.f32.mrf.mxu0
    %v564 = vadd.f32 0.0, %v563
    %565 = vmatmul.f32.gmra.mxu0 %v66
    %v566 = vpop.f32.mrf.mxu0
    %v567 = vadd.f32 0.0, %v566
    %568 = vmatmul.f32.gmra.mxu0 %v67
    %v569 = vpop.f32.mrf.mxu0
    %v570 = vadd.f32 0.0, %v569
    %571 = vmatmul.f32.gmra.mxu0 %v68
    %v572 = vpop.f32.mrf.mxu0
    %v573 = vadd.f32 0.0, %v572
    %574 = vmatmul.f32.gmra.mxu0 %v69
    %v575 = vpop.f32.mrf.mxu0
    %v576 = vadd.f32 0.0, %v575
    %577 = vmatmul.f32.gmra.mxu0 %v70
    %v578 = vpop.f32.mrf.mxu0
    %v579 = vadd.f32 0.0, %v578
    %580 = vdwg.mxu0
    %581 = vmatpush.msra.mxu0 %v579
    %582 = vmatpush.msra.mxu0 %v576
    %583 = vmatpush.msra.mxu0 %v573
    %584 = vmatpush.msra.mxu0 %v570
    %585 = vmatpush.msra.mxu0 %v567
    %586 = vmatpush.msra.mxu0 %v564
    %587 = vmatpush.msra.mxu0 %v561
    %588 = vmatpush.msra.mxu0 %v558
    %589 = vmatpush.msra.mxu0 %v555
    %590 = vmatpush.msra.mxu0 %v552
    %591 = vmatpush.msra.mxu0 %v549
    %592 = vmatpush.msra.mxu0 %v546
    %593 = vmatpush.msra.mxu0 %v543
    %594 = vmatpush.msra.mxu0 %v540
    %595 = vmatpush.msra.mxu0 %v537
    %596 = vmatpush.msra.mxu0 %v534
    %597 = vmatmul.f32.gmra.mxu0 %v55
    %v598 = vpop.f32.mrf.mxu0
    %v599 = vadd.f32 0.0, %v598
    %600 = vmatmul.f32.gmra.mxu0 %v56
    %v601 = vpop.f32.mrf.mxu0
    %v602 = vadd.f32 0.0, %v601
    %603 = vmatmul.f32.gmra.mxu0 %v57
    %v604 = vpop.f32.mrf.mxu0
    %v605 = vadd.f32 0.0, %v604
    %606 = vmatmul.f32.gmra.mxu0 %v58
    %v607 = vpop.f32.mrf.mxu0
    %v608 = vadd.f32 0.0, %v607
    %609 = vmatmul.f32.gmra.mxu0 %v59
    %v610 = vpop.f32.mrf.mxu0
    %v611 = vadd.f32 0.0, %v610
    %612 = vmatmul.f32.gmra.mxu0 %v60
    %v613 = vpop.f32.mrf.mxu0
    %v614 = vadd.f32 0.0, %v613
    %615 = vmatmul.f32.gmra.mxu0 %v61
    %v616 = vpop.f32.mrf.mxu0
    %v617 = vadd.f32 0.0, %v616
    %618 = vmatmul.f32.gmra.mxu0 %v62
    %v619 = vpop.f32.mrf.mxu0
    %v620 = vadd.f32 0.0, %v619
    %621 = vmatmul.f32.gmra.mxu0 %v63
    %v622 = vpop.f32.mrf.mxu0
    %v623 = vadd.f32 0.0, %v622
    %624 = vmatmul.f32.gmra.mxu0 %v64
    %v625 = vpop.f32.mrf.mxu0
    %v626 = vadd.f32 0.0, %v625
    %627 = vmatmul.f32.gmra.mxu0 %v65
    %v628 = vpop.f32.mrf.mxu0
    %v629 = vadd.f32 0.0, %v628
    %630 = vmatmul.f32.gmra.mxu0 %v66
    %v631 = vpop.f32.mrf.mxu0
    %v632 = vadd.f32 0.0, %v631
    %633 = vmatmul.f32.gmra.mxu0 %v67
    %v634 = vpop.f32.mrf.mxu0
    %v635 = vadd.f32 0.0, %v634
    %636 = vmatmul.f32.gmra.mxu0 %v68
    %v637 = vpop.f32.mrf.mxu0
    %v638 = vadd.f32 0.0, %v637
    %639 = vmatmul.f32.gmra.mxu0 %v69
    %v640 = vpop.f32.mrf.mxu0
    %v641 = vadd.f32 0.0, %v640
    %642 = vmatmul.f32.gmra.mxu0 %v70
    %v643 = vpop.f32.mrf.mxu0
    %v644 = vadd.f32 0.0, %v643
    %645 = vdwg.mxu0
    %v646 = vld [vmem:[#allocation5] sm:$0xff]
    %v647 = vld [vmem:[#allocation5 + $0x8] sm:$0xff]
    %vm648 = vcmask 130048
    %v650 = vsel %vm648, %v534, 0
    %v653 = vsel %vm648, %v537, 0
    %v656 = vsel %vm648, %v540, 0
    %v659 = vsel %vm648, %v543, 0
    %v662 = vsel %vm648, %v546, 0
    %v665 = vsel %vm648, %v549, 0
    %v668 = vsel %vm648, %v552, 0
    %v671 = vsel %vm648, %v555, 0
    %v674 = vsel %vm648, %v558, 0
    %v677 = vsel %vm648, %v561, 0
    %v680 = vsel %vm648, %v564, 0
    %v683 = vsel %vm648, %v567, 0
    %v686 = vsel %vm648, %v570, 0
    %v689 = vsel %vm648, %v573, 0
    %v692 = vsel %vm648, %v576, 0
    %v695 = vsel %vm648, %v579, 0
    %697 = vmatpush.msra.mxu0 0.0
    %698 = vmatpush.msra.mxu0 0.0
    %699 = vmatpush.msra.mxu0 0.0
    %700 = vmatpush.msra.mxu0 0.0
    %701 = vmatpush.msra.mxu0 0.0
    %702 = vmatpush.msra.mxu0 0.0
    %703 = vmatpush.msra.mxu0 0.0
    %704 = vmatpush.msra.mxu0 0.0
    %705 = vmatpush.msra.mxu0 0.0
    %706 = vmatpush.msra.mxu0 0.0
    %707 = vmatpush.msra.mxu0 0.0
    %708 = vmatpush.msra.mxu0 0.0
    %709 = vmatpush.msra.mxu0 0.0
    %710 = vmatpush.msra.mxu0 0.0
    %711 = vmatpush.msra.mxu0 %v647
    %712 = vmatpush.msra.mxu0 %v646
    %713 = vmatmul.f32.gmra.mxu0 %v650
    %v714 = vpop.f32.mrf.mxu0
    %v715 = vadd.f32 0.0, %v714
    %716 = vmatmul.f32.gmra.mxu0 %v653
    %v717 = vpop.f32.mrf.mxu0
    %v718 = vadd.f32 0.0, %v717
    %719 = vmatmul.f32.gmra.mxu0 %v656
    %v720 = vpop.f32.mrf.mxu0
    %v721 = vadd.f32 0.0, %v720
    %722 = vmatmul.f32.gmra.mxu0 %v659
    %v723 = vpop.f32.mrf.mxu0
    %v724 = vadd.f32 0.0, %v723
    %725 = vmatmul.f32.gmra.mxu0 %v662
    %v726 = vpop.f32.mrf.mxu0
    %v727 = vadd.f32 0.0, %v726
    %728 = vmatmul.f32.gmra.mxu0 %v665
    %v729 = vpop.f32.mrf.mxu0
    %v730 = vadd.f32 0.0, %v729
    %731 = vmatmul.f32.gmra.mxu0 %v668
    %v732 = vpop.f32.mrf.mxu0
    %v733 = vadd.f32 0.0, %v732
    %734 = vmatmul.f32.gmra.mxu0 %v671
    %v735 = vpop.f32.mrf.mxu0
    %v736 = vadd.f32 0.0, %v735
    %737 = vmatmul.f32.gmra.mxu0 %v674
    %v738 = vpop.f32.mrf.mxu0
    %v739 = vadd.f32 0.0, %v738
    %740 = vmatmul.f32.gmra.mxu0 %v677
    %v741 = vpop.f32.mrf.mxu0
    %v742 = vadd.f32 0.0, %v741
    %743 = vmatmul.f32.gmra.mxu0 %v680
    %v744 = vpop.f32.mrf.mxu0
    %v745 = vadd.f32 0.0, %v744
    %746 = vmatmul.f32.gmra.mxu0 %v683
    %v747 = vpop.f32.mrf.mxu0
    %v748 = vadd.f32 0.0, %v747
    %749 = vmatmul.f32.gmra.mxu0 %v686
    %v750 = vpop.f32.mrf.mxu0
    %v751 = vadd.f32 0.0, %v750
    %752 = vmatmul.f32.gmra.mxu0 %v689
    %v753 = vpop.f32.mrf.mxu0
    %v754 = vadd.f32 0.0, %v753
    %755 = vmatmul.f32.gmra.mxu0 %v692
    %v756 = vpop.f32.mrf.mxu0
    %v757 = vadd.f32 0.0, %v756
    %758 = vmatmul.f32.gmra.mxu0 %v695
    %v759 = vpop.f32.mrf.mxu0
    %v760 = vadd.f32 0.0, %v759
    %761 = vdwg.mxu0
    %762 = vmatpush.msra.mxu0 %v760
    %763 = vmatpush.msra.mxu0 %v757
    %764 = vmatpush.msra.mxu0 %v754
    %765 = vmatpush.msra.mxu0 %v751
    %766 = vmatpush.msra.mxu0 %v748
    %767 = vmatpush.msra.mxu0 %v745
    %768 = vmatpush.msra.mxu0 %v742
    %769 = vmatpush.msra.mxu0 %v739
    %770 = vmatpush.msra.mxu0 %v736
    %771 = vmatpush.msra.mxu0 %v733
    %772 = vmatpush.msra.mxu0 %v730
    %773 = vmatpush.msra.mxu0 %v727
    %774 = vmatpush.msra.mxu0 %v724
    %775 = vmatpush.msra.mxu0 %v721
    %776 = vmatpush.msra.mxu0 %v718
    %777 = vmatpush.msra.mxu0 %v715
    %778 = vmatmul.f32.gmra.mxu0 %v55
    %v779 = vpop.f32.mrf.mxu0
    %v780 = vadd.f32 0.0, %v779
    %781 = vmatmul.f32.gmra.mxu0 %v56
    %v782 = vpop.f32.mrf.mxu0
    %v783 = vadd.f32 0.0, %v782
    %784 = vmatmul.f32.gmra.mxu0 %v57
    %v785 = vpop.f32.mrf.mxu0
    %v786 = vadd.f32 0.0, %v785
    %787 = vmatmul.f32.gmra.mxu0 %v58
    %v788 = vpop.f32.mrf.mxu0
    %v789 = vadd.f32 0.0, %v788
    %790 = vmatmul.f32.gmra.mxu0 %v59
    %v791 = vpop.f32.mrf.mxu0
    %v792 = vadd.f32 0.0, %v791
    %793 = vmatmul.f32.gmra.mxu0 %v60
    %v794 = vpop.f32.mrf.mxu0
    %v795 = vadd.f32 0.0, %v794
    %796 = vmatmul.f32.gmra.mxu0 %v61
    %v797 = vpop.f32.mrf.mxu0
    %v798 = vadd.f32 0.0, %v797
    %799 = vmatmul.f32.gmra.mxu0 %v62
    %v800 = vpop.f32.mrf.mxu0
    %v801 = vadd.f32 0.0, %v800
    %802 = vmatmul.f32.gmra.mxu0 %v63
    %v803 = vpop.f32.mrf.mxu0
    %v804 = vadd.f32 0.0, %v803
    %805 = vmatmul.f32.gmra.mxu0 %v64
    %v806 = vpop.f32.mrf.mxu0
    %v807 = vadd.f32 0.0, %v806
    %808 = vmatmul.f32.gmra.mxu0 %v65
    %v809 = vpop.f32.mrf.mxu0
    %v810 = vadd.f32 0.0, %v809
    %811 = vmatmul.f32.gmra.mxu0 %v66
    %v812 = vpop.f32.mrf.mxu0
    %v813 = vadd.f32 0.0, %v812
    %814 = vmatmul.f32.gmra.mxu0 %v67
    %v815 = vpop.f32.mrf.mxu0
    %v816 = vadd.f32 0.0, %v815
    %817 = vmatmul.f32.gmra.mxu0 %v68
    %v818 = vpop.f32.mrf.mxu0
    %v819 = vadd.f32 0.0, %v818
    %820 = vmatmul.f32.gmra.mxu0 %v69
    %v821 = vpop.f32.mrf.mxu0
    %v822 = vadd.f32 0.0, %v821
    %823 = vmatmul.f32.gmra.mxu0 %v70
    %v824 = vpop.f32.mrf.mxu0
    %v825 = vadd.f32 0.0, %v824
    %826 = vdwg.mxu0
    %827 = vmatpush.msra.mxu0 %v825
    %828 = vmatpush.msra.mxu0 %v822
    %829 = vmatpush.msra.mxu0 %v819
    %830 = vmatpush.msra.mxu0 %v816
    %831 = vmatpush.msra.mxu0 %v813
    %832 = vmatpush.msra.mxu0 %v810
    %833 = vmatpush.msra.mxu0 %v807
    %834 = vmatpush.msra.mxu0 %v804
    %835 = vmatpush.msra.mxu0 %v801
    %836 = vmatpush.msra.mxu0 %v798
    %837 = vmatpush.msra.mxu0 %v795
    %838 = vmatpush.msra.mxu0 %v792
    %839 = vmatpush.msra.mxu0 %v789
    %840 = vmatpush.msra.mxu0 %v786
    %841 = vmatpush.msra.mxu0 %v783
    %842 = vmatpush.msra.mxu0 %v780
    %843 = vmatmul.f32.gmra.mxu0 %v55
    %v844 = vpop.f32.mrf.mxu0
    %v845 = vadd.f32 0.0, %v844
    %846 = vmatmul.f32.gmra.mxu0 %v56
    %v847 = vpop.f32.mrf.mxu0
    %v848 = vadd.f32 0.0, %v847
    %849 = vmatmul.f32.gmra.mxu0 %v57
    %v850 = vpop.f32.mrf.mxu0
    %v851 = vadd.f32 0.0, %v850
    %852 = vmatmul.f32.gmra.mxu0 %v58
    %v853 = vpop.f32.mrf.mxu0
    %v854 = vadd.f32 0.0, %v853
    %855 = vmatmul.f32.gmra.mxu0 %v59
    %v856 = vpop.f32.mrf.mxu0
    %v857 = vadd.f32 0.0, %v856
    %858 = vmatmul.f32.gmra.mxu0 %v60
    %v859 = vpop.f32.mrf.mxu0
    %v860 = vadd.f32 0.0, %v859
    %861 = vmatmul.f32.gmra.mxu0 %v61
    %v862 = vpop.f32.mrf.mxu0
    %v863 = vadd.f32 0.0, %v862
    %864 = vmatmul.f32.gmra.mxu0 %v62
    %v865 = vpop.f32.mrf.mxu0
    %v866 = vadd.f32 0.0, %v865
    %867 = vmatmul.f32.gmra.mxu0 %v63
    %v868 = vpop.f32.mrf.mxu0
    %v869 = vadd.f32 0.0, %v868
    %870 = vmatmul.f32.gmra.mxu0 %v64
    %v871 = vpop.f32.mrf.mxu0
    %v872 = vadd.f32 0.0, %v871
    %873 = vmatmul.f32.gmra.mxu0 %v65
    %v874 = vpop.f32.mrf.mxu0
    %v875 = vadd.f32 0.0, %v874
    %876 = vmatmul.f32.gmra.mxu0 %v66
    %v877 = vpop.f32.mrf.mxu0
    %v878 = vadd.f32 0.0, %v877
    %879 = vmatmul.f32.gmra.mxu0 %v67
    %v880 = vpop.f32.mrf.mxu0
    %v881 = vadd.f32 0.0, %v880
    %882 = vmatmul.f32.gmra.mxu0 %v68
    %v883 = vpop.f32.mrf.mxu0
    %v884 = vadd.f32 0.0, %v883
    %885 = vmatmul.f32.gmra.mxu0 %v69
    %v886 = vpop.f32.mrf.mxu0
    %v887 = vadd.f32 0.0, %v886
    %888 = vmatmul.f32.gmra.mxu0 %v70
    %v889 = vpop.f32.mrf.mxu0
    %v890 = vadd.f32 0.0, %v889
    %891 = vdwg.mxu0
    %v893 = vsel %vm648, %v780, 0
    %v896 = vsel %vm648, %v783, 0
    %v899 = vsel %vm648, %v786, 0
    %v902 = vsel %vm648, %v789, 0
    %v905 = vsel %vm648, %v792, 0
    %v908 = vsel %vm648, %v795, 0
    %v911 = vsel %vm648, %v798, 0
    %v914 = vsel %vm648, %v801, 0
    %v917 = vsel %vm648, %v804, 0
    %v920 = vsel %vm648, %v807, 0
    %v923 = vsel %vm648, %v810, 0
    %v926 = vsel %vm648, %v813, 0
    %v929 = vsel %vm648, %v816, 0
    %v932 = vsel %vm648, %v819, 0
    %v935 = vsel %vm648, %v822, 0
    %v938 = vsel %vm648, %v825, 0
    %940 = vmatpush.xpose.msra.mxu0 %v938
    %941 = vmatpush.xpose.msra.mxu0 %v935
    %942 = vmatpush.xpose.msra.mxu0 %v932
    %943 = vmatpush.xpose.msra.mxu0 %v929
    %944 = vmatpush.xpose.msra.mxu0 %v926
    %945 = vmatpush.xpose.msra.mxu0 %v923
    %946 = vmatpush.xpose.msra.mxu0 %v920
    %947 = vmatpush.xpose.msra.mxu0 %v917
    %948 = vmatpush.xpose.msra.mxu0 %v914
    %949 = vmatpush.xpose.msra.mxu0 %v911
    %950 = vmatpush.xpose.msra.mxu0 %v908
    %951 = vmatpush.xpose.msra.mxu0 %v905
    %952 = vmatpush.xpose.msra.mxu0 %v902
    %953 = vmatpush.xpose.msra.mxu0 %v899
    %954 = vmatpush.xpose.msra.mxu0 %v896
    %955 = vmatpush.xpose.msra.mxu0 %v893
    %956 = vmatmul.f32.gmra.mxu0 %v893
    %v957 = vpop.f32.mrf.mxu0
    %v958 = vadd.f32 0.0, %v957
    %959 = vmatmul.f32.gmra.mxu0 %v896
    %v960 = vpop.f32.mrf.mxu0
    %v961 = vadd.f32 0.0, %v960
    %962 = vmatmul.f32.gmra.mxu0 %v899
    %v963 = vpop.f32.mrf.mxu0
    %v964 = vadd.f32 0.0, %v963
    %965 = vmatmul.f32.gmra.mxu0 %v902
    %v966 = vpop.f32.mrf.mxu0
    %v967 = vadd.f32 0.0, %v966
    %968 = vmatmul.f32.gmra.mxu0 %v905
    %v969 = vpop.f32.mrf.mxu0
    %v970 = vadd.f32 0.0, %v969
    %971 = vmatmul.f32.gmra.mxu0 %v908
    %v972 = vpop.f32.mrf.mxu0
    %v973 = vadd.f32 0.0, %v972
    %974 = vmatmul.f32.gmra.mxu0 %v911
    %v975 = vpop.f32.mrf.mxu0
    %v976 = vadd.f32 0.0, %v975
    %977 = vmatmul.f32.gmra.mxu0 %v914
    %v978 = vpop.f32.mrf.mxu0
    %v979 = vadd.f32 0.0, %v978
    %980 = vmatmul.f32.gmra.mxu0 %v917
    %v981 = vpop.f32.mrf.mxu0
    %v982 = vadd.f32 0.0, %v981
    %983 = vmatmul.f32.gmra.mxu0 %v920
    %v984 = vpop.f32.mrf.mxu0
    %v985 = vadd.f32 0.0, %v984
    %986 = vmatmul.f32.gmra.mxu0 %v923
    %v987 = vpop.f32.mrf.mxu0
    %v988 = vadd.f32 0.0, %v987
    %989 = vmatmul.f32.gmra.mxu0 %v926
    %v990 = vpop.f32.mrf.mxu0
    %v991 = vadd.f32 0.0, %v990
    %992 = vmatmul.f32.gmra.mxu0 %v929
    %v993 = vpop.f32.mrf.mxu0
    %v994 = vadd.f32 0.0, %v993
    %995 = vmatmul.f32.gmra.mxu0 %v932
    %v996 = vpop.f32.mrf.mxu0
    %v997 = vadd.f32 0.0, %v996
    %998 = vmatmul.f32.gmra.mxu0 %v935
    %v999 = vpop.f32.mrf.mxu0
    %v1000 = vadd.f32 0.0, %v999
    %1001 = vmatmul.f32.gmra.mxu0 %v938
    %v1002 = vpop.f32.mrf.mxu0
    %v1003 = vadd.f32 0.0, %v1002
    %1004 = vdwg.mxu0
    %v1005 = vxor.u32 %v958, 2147483648
    %v1006 = vxor.u32 %v961, 2147483648
    %v1007 = vxor.u32 %v964, 2147483648
    %v1008 = vxor.u32 %v967, 2147483648
    %v1009 = vxor.u32 %v970, 2147483648
    %v1010 = vxor.u32 %v973, 2147483648
    %v1011 = vxor.u32 %v976, 2147483648
    %v1012 = vxor.u32 %v979, 2147483648
    %v1013 = vxor.u32 %v982, 2147483648
    %v1014 = vxor.u32 %v985, 2147483648
    %v1015 = vxor.u32 %v988, 2147483648
    %v1016 = vxor.u32 %v991, 2147483648
    %v1017 = vxor.u32 %v994, 2147483648
    %v1018 = vxor.u32 %v997, 2147483648
    %v1019 = vxor.u32 %v1000, 2147483648
    %v1020 = vxor.u32 %v1003, 2147483648
    %v1021 = vmul.f32 %v1005, 1.442695
    %v1022 = vpow.pop %v1021
    %v1023 = vmul.f32 %v1006, 1.442695
    %v1024 = vpow.pop %v1023
    %v1025 = vmul.f32 %v1007, 1.442695
    %v1026 = vpow.pop %v1025
    %v1027 = vmul.f32 %v1008, 1.442695
    %v1028 = vpow.pop %v1027
    %v1029 = vmul.f32 %v1009, 1.442695
    %v1030 = vpow.pop %v1029
    %v1031 = vmul.f32 %v1010, 1.442695
    %v1032 = vpow.pop %v1031
    %v1033 = vmul.f32 %v1011, 1.442695
    %v1034 = vpow.pop %v1033
    %v1035 = vmul.f32 %v1012, 1.442695
    %v1036 = vpow.pop %v1035
    %v1037 = vmul.f32 %v1013, 1.442695
    %v1038 = vpow.pop %v1037
    %v1039 = vmul.f32 %v1014, 1.442695
    %v1040 = vpow.pop %v1039
    %v1041 = vmul.f32 %v1015, 1.442695
    %v1042 = vpow.pop %v1041
    %v1043 = vmul.f32 %v1016, 1.442695
    %v1044 = vpow.pop %v1043
    %v1045 = vmul.f32 %v1017, 1.442695
    %v1046 = vpow.pop %v1045
    %v1047 = vmul.f32 %v1018, 1.442695
    %v1048 = vpow.pop %v1047
    %v1049 = vmul.f32 %v1019, 1.442695
    %v1050 = vpow.pop %v1049
    %v1051 = vmul.f32 %v1020, 1.442695
    %v1052 = vpow.pop %v1051
    %v1053 = vadd.f32 %v1022, 1.0
    %v1054 = vadd.f32 %v1024, 1.0
    %v1055 = vadd.f32 %v1026, 1.0
    %v1056 = vadd.f32 %v1028, 1.0
    %v1057 = vadd.f32 %v1030, 1.0
    %v1058 = vadd.f32 %v1032, 1.0
    %v1059 = vadd.f32 %v1034, 1.0
    %v1060 = vadd.f32 %v1036, 1.0
    %v1061 = vadd.f32 %v1038, 1.0
    %v1062 = vadd.f32 %v1040, 1.0
    %v1063 = vadd.f32 %v1042, 1.0
    %v1064 = vadd.f32 %v1044, 1.0
    %v1065 = vadd.f32 %v1046, 1.0
    %v1066 = vadd.f32 %v1048, 1.0
    %v1067 = vadd.f32 %v1050, 1.0
    %v1068 = vadd.f32 %v1052, 1.0
    %v1069 = vrcp.pop %v1053
    %v1070 = vmul.f32 %v1053, %v1069
    %v1071 = vsub.f32 1.0, %v1070
    %v1072 = vmul.f32 %v1069, %v1071
    %v1073 = vadd.f32 %v1069, %v1072
    %vm1074 = vweird.f32 %v1053
    %vm1075 = vweird.f32 %v1069
    %vm1076 = vmor %vm1074, %vm1075
    %v1077 = vsel %vm1076, %v1069, %v1073
    %v1078 = vand.u32 2147483647, %v1053
    %vm1079 = vcmp.eq.f32.partialorder %v1078, 8.507059e+37
    %v1080 = vand.u32 %v1053, 2147483648
    %v1081 = vor.u32 1.1754944e-38, %v1080
    %v1082 = vsel %vm1079, %v1081, %v1077
    %v1083 = vmul.f32 1.0, %v1082
    %v1084 = vrcp.pop %v1054
    %v1085 = vmul.f32 %v1054, %v1084
    %v1086 = vsub.f32 1.0, %v1085
    %v1087 = vmul.f32 %v1084, %v1086
    %v1088 = vadd.f32 %v1084, %v1087
    %vm1089 = vweird.f32 %v1054
    %vm1090 = vweird.f32 %v1084
    %vm1091 = vmor %vm1089, %vm1090
    %v1092 = vsel %vm1091, %v1084, %v1088
    %v1093 = vand.u32 2147483647, %v1054
    %vm1094 = vcmp.eq.f32.partialorder %v1093, 8.507059e+37
    %v1095 = vand.u32 %v1054, 2147483648
    %v1096 = vor.u32 1.1754944e-38, %v1095
    %v1097 = vsel %vm1094, %v1096, %v1092
    %v1098 = vmul.f32 1.0, %v1097
    %v1099 = vrcp.pop %v1055
    %v1100 = vmul.f32 %v1055, %v1099
    %v1101 = vsub.f32 1.0, %v1100
    %v1102 = vmul.f32 %v1099, %v1101
    %v1103 = vadd.f32 %v1099, %v1102
    %vm1104 = vweird.f32 %v1055
    %vm1105 = vweird.f32 %v1099
    %vm1106 = vmor %vm1104, %vm1105
    %v1107 = vsel %vm1106, %v1099, %v1103
    %v1108 = vand.u32 2147483647, %v1055
    %vm1109 = vcmp.eq.f32.partialorder %v1108, 8.507059e+37
    %v1110 = vand.u32 %v1055, 2147483648
    %v1111 = vor.u32 1.1754944e-38, %v1110
    %v1112 = vsel %vm1109, %v1111, %v1107
    %v1113 = vmul.f32 1.0, %v1112
    %v1114 = vrcp.pop %v1056
    %v1115 = vmul.f32 %v1056, %v1114
    %v1116 = vsub.f32 1.0, %v1115
    %v1117 = vmul.f32 %v1114, %v1116
    %v1118 = vadd.f32 %v1114, %v1117
    %vm1119 = vweird.f32 %v1056
    %vm1120 = vweird.f32 %v1114
    %vm1121 = vmor %vm1119, %vm1120
    %v1122 = vsel %vm1121, %v1114, %v1118
    %v1123 = vand.u32 2147483647, %v1056
    %vm1124 = vcmp.eq.f32.partialorder %v1123, 8.507059e+37
    %v1125 = vand.u32 %v1056, 2147483648
    %v1126 = vor.u32 1.1754944e-38, %v1125
    %v1127 = vsel %vm1124, %v1126, %v1122
    %v1128 = vmul.f32 1.0, %v1127
    %v1129 = vrcp.pop %v1057
    %v1130 = vmul.f32 %v1057, %v1129
    %v1131 = vsub.f32 1.0, %v1130
    %v1132 = vmul.f32 %v1129, %v1131
    %v1133 = vadd.f32 %v1129, %v1132
    %vm1134 = vweird.f32 %v1057
    %vm1135 = vweird.f32 %v1129
    %vm1136 = vmor %vm1134, %vm1135
    %v1137 = vsel %vm1136, %v1129, %v1133
    %v1138 = vand.u32 2147483647, %v1057
    %vm1139 = vcmp.eq.f32.partialorder %v1138, 8.507059e+37
    %v1140 = vand.u32 %v1057, 2147483648
    %v1141 = vor.u32 1.1754944e-38, %v1140
    %v1142 = vsel %vm1139, %v1141, %v1137
    %v1143 = vmul.f32 1.0, %v1142
    %v1144 = vrcp.pop %v1058
    %v1145 = vmul.f32 %v1058, %v1144
    %v1146 = vsub.f32 1.0, %v1145
    %v1147 = vmul.f32 %v1144, %v1146
    %v1148 = vadd.f32 %v1144, %v1147
    %vm1149 = vweird.f32 %v1058
    %vm1150 = vweird.f32 %v1144
    %vm1151 = vmor %vm1149, %vm1150
    %v1152 = vsel %vm1151, %v1144, %v1148
    %v1153 = vand.u32 2147483647, %v1058
    %vm1154 = vcmp.eq.f32.partialorder %v1153, 8.507059e+37
    %v1155 = vand.u32 %v1058, 2147483648
    %v1156 = vor.u32 1.1754944e-38, %v1155
    %v1157 = vsel %vm1154, %v1156, %v1152
    %v1158 = vmul.f32 1.0, %v1157
    %v1159 = vrcp.pop %v1059
    %v1160 = vmul.f32 %v1059, %v1159
    %v1161 = vsub.f32 1.0, %v1160
    %v1162 = vmul.f32 %v1159, %v1161
    %v1163 = vadd.f32 %v1159, %v1162
    %vm1164 = vweird.f32 %v1059
    %vm1165 = vweird.f32 %v1159
    %vm1166 = vmor %vm1164, %vm1165
    %v1167 = vsel %vm1166, %v1159, %v1163
    %v1168 = vand.u32 2147483647, %v1059
    %vm1169 = vcmp.eq.f32.partialorder %v1168, 8.507059e+37
    %v1170 = vand.u32 %v1059, 2147483648
    %v1171 = vor.u32 1.1754944e-38, %v1170
    %v1172 = vsel %vm1169, %v1171, %v1167
    %v1173 = vmul.f32 1.0, %v1172
    %v1174 = vrcp.pop %v1060
    %v1175 = vmul.f32 %v1060, %v1174
    %v1176 = vsub.f32 1.0, %v1175
    %v1177 = vmul.f32 %v1174, %v1176
    %v1178 = vadd.f32 %v1174, %v1177
    %vm1179 = vweird.f32 %v1060
    %vm1180 = vweird.f32 %v1174
    %vm1181 = vmor %vm1179, %vm1180
    %v1182 = vsel %vm1181, %v1174, %v1178
    %v1183 = vand.u32 2147483647, %v1060
    %vm1184 = vcmp.eq.f32.partialorder %v1183, 8.507059e+37
    %v1185 = vand.u32 %v1060, 2147483648
    %v1186 = vor.u32 1.1754944e-38, %v1185
    %v1187 = vsel %vm1184, %v1186, %v1182
    %v1188 = vmul.f32 1.0, %v1187
    %v1189 = vrcp.pop %v1061
    %v1190 = vmul.f32 %v1061, %v1189
    %v1191 = vsub.f32 1.0, %v1190
    %v1192 = vmul.f32 %v1189, %v1191
    %v1193 = vadd.f32 %v1189, %v1192
    %vm1194 = vweird.f32 %v1061
    %vm1195 = vweird.f32 %v1189
    %vm1196 = vmor %vm1194, %vm1195
    %v1197 = vsel %vm1196, %v1189, %v1193
    %v1198 = vand.u32 2147483647, %v1061
    %vm1199 = vcmp.eq.f32.partialorder %v1198, 8.507059e+37
    %v1200 = vand.u32 %v1061, 2147483648
    %v1201 = vor.u32 1.1754944e-38, %v1200
    %v1202 = vsel %vm1199, %v1201, %v1197
    %v1203 = vmul.f32 1.0, %v1202
    %v1204 = vrcp.pop %v1062
    %v1205 = vmul.f32 %v1062, %v1204
    %v1206 = vsub.f32 1.0, %v1205
    %v1207 = vmul.f32 %v1204, %v1206
    %v1208 = vadd.f32 %v1204, %v1207
    %vm1209 = vweird.f32 %v1062
    %vm1210 = vweird.f32 %v1204
    %vm1211 = vmor %vm1209, %vm1210
    %v1212 = vsel %vm1211, %v1204, %v1208
    %v1213 = vand.u32 2147483647, %v1062
    %vm1214 = vcmp.eq.f32.partialorder %v1213, 8.507059e+37
    %v1215 = vand.u32 %v1062, 2147483648
    %v1216 = vor.u32 1.1754944e-38, %v1215
    %v1217 = vsel %vm1214, %v1216, %v1212
    %v1218 = vmul.f32 1.0, %v1217
    %v1219 = vrcp.pop %v1063
    %v1220 = vmul.f32 %v1063, %v1219
    %v1221 = vsub.f32 1.0, %v1220
    %v1222 = vmul.f32 %v1219, %v1221
    %v1223 = vadd.f32 %v1219, %v1222
    %vm1224 = vweird.f32 %v1063
    %vm1225 = vweird.f32 %v1219
    %vm1226 = vmor %vm1224, %vm1225
    %v1227 = vsel %vm1226, %v1219, %v1223
    %v1228 = vand.u32 2147483647, %v1063
    %vm1229 = vcmp.eq.f32.partialorder %v1228, 8.507059e+37
    %v1230 = vand.u32 %v1063, 2147483648
    %v1231 = vor.u32 1.1754944e-38, %v1230
    %v1232 = vsel %vm1229, %v1231, %v1227
    %v1233 = vmul.f32 1.0, %v1232
    %v1234 = vrcp.pop %v1064
    %v1235 = vmul.f32 %v1064, %v1234
    %v1236 = vsub.f32 1.0, %v1235
    %v1237 = vmul.f32 %v1234, %v1236
    %v1238 = vadd.f32 %v1234, %v1237
    %vm1239 = vweird.f32 %v1064
    %vm1240 = vweird.f32 %v1234
    %vm1241 = vmor %vm1239, %vm1240
    %v1242 = vsel %vm1241, %v1234, %v1238
    %v1243 = vand.u32 2147483647, %v1064
    %vm1244 = vcmp.eq.f32.partialorder %v1243, 8.507059e+37
    %v1245 = vand.u32 %v1064, 2147483648
    %v1246 = vor.u32 1.1754944e-38, %v1245
    %v1247 = vsel %vm1244, %v1246, %v1242
    %v1248 = vmul.f32 1.0, %v1247
    %v1249 = vrcp.pop %v1065
    %v1250 = vmul.f32 %v1065, %v1249
    %v1251 = vsub.f32 1.0, %v1250
    %v1252 = vmul.f32 %v1249, %v1251
    %v1253 = vadd.f32 %v1249, %v1252
    %vm1254 = vweird.f32 %v1065
    %vm1255 = vweird.f32 %v1249
    %vm1256 = vmor %vm1254, %vm1255
    %v1257 = vsel %vm1256, %v1249, %v1253
    %v1258 = vand.u32 2147483647, %v1065
    %vm1259 = vcmp.eq.f32.partialorder %v1258, 8.507059e+37
    %v1260 = vand.u32 %v1065, 2147483648
    %v1261 = vor.u32 1.1754944e-38, %v1260
    %v1262 = vsel %vm1259, %v1261, %v1257
    %v1263 = vmul.f32 1.0, %v1262
    %v1264 = vrcp.pop %v1066
    %v1265 = vmul.f32 %v1066, %v1264
    %v1266 = vsub.f32 1.0, %v1265
    %v1267 = vmul.f32 %v1264, %v1266
    %v1268 = vadd.f32 %v1264, %v1267
    %vm1269 = vweird.f32 %v1066
    %vm1270 = vweird.f32 %v1264
    %vm1271 = vmor %vm1269, %vm1270
    %v1272 = vsel %vm1271, %v1264, %v1268
    %v1273 = vand.u32 2147483647, %v1066
    %vm1274 = vcmp.eq.f32.partialorder %v1273, 8.507059e+37
    %v1275 = vand.u32 %v1066, 2147483648
    %v1276 = vor.u32 1.1754944e-38, %v1275
    %v1277 = vsel %vm1274, %v1276, %v1272
    %v1278 = vmul.f32 1.0, %v1277
    %v1279 = vrcp.pop %v1067
    %v1280 = vmul.f32 %v1067, %v1279
    %v1281 = vsub.f32 1.0, %v1280
    %v1282 = vmul.f32 %v1279, %v1281
    %v1283 = vadd.f32 %v1279, %v1282
    %vm1284 = vweird.f32 %v1067
    %vm1285 = vweird.f32 %v1279
    %vm1286 = vmor %vm1284, %vm1285
    %v1287 = vsel %vm1286, %v1279, %v1283
    %v1288 = vand.u32 2147483647, %v1067
    %vm1289 = vcmp.eq.f32.partialorder %v1288, 8.507059e+37
    %v1290 = vand.u32 %v1067, 2147483648
    %v1291 = vor.u32 1.1754944e-38, %v1290
    %v1292 = vsel %vm1289, %v1291, %v1287
    %v1293 = vmul.f32 1.0, %v1292
    %v1294 = vrcp.pop %v1068
    %v1295 = vmul.f32 %v1068, %v1294
    %v1296 = vsub.f32 1.0, %v1295
    %v1297 = vmul.f32 %v1294, %v1296
    %v1298 = vadd.f32 %v1294, %v1297
    %vm1299 = vweird.f32 %v1068
    %vm1300 = vweird.f32 %v1294
    %vm1301 = vmor %vm1299, %vm1300
    %v1302 = vsel %vm1301, %v1294, %v1298
    %v1303 = vand.u32 2147483647, %v1068
    %vm1304 = vcmp.eq.f32.partialorder %v1303, 8.507059e+37
    %v1305 = vand.u32 %v1068, 2147483648
    %v1306 = vor.u32 1.1754944e-38, %v1305
    %v1307 = vsel %vm1304, %v1306, %v1302
    %v1308 = vmul.f32 1.0, %v1307
    %1309 = vst [vmem:[#allocation7] sm:$0xff] %v1083
    %1310 = vst [vmem:[#allocation7 + $0x8] sm:$0xff] %v1098
    %1311 = vst [vmem:[#allocation7 + $0x10] sm:$0xff] %v1113
    %1312 = vst [vmem:[#allocation7 + $0x18] sm:$0xff] %v1128
    %1313 = vst [vmem:[#allocation7 + $0x20] sm:$0xff] %v1143
    %1314 = vst [vmem:[#allocation7 + $0x28] sm:$0xff] %v1158
    %1315 = vst [vmem:[#allocation7 + $0x30] sm:$0xff] %v1173
    %1316 = vst [vmem:[#allocation7 + $0x38] sm:$0xff] %v1188
    %1317 = vst [vmem:[#allocation7 + $0x40] sm:$0xff] %v1203
    %1318 = vst [vmem:[#allocation7 + $0x48] sm:$0xff] %v1218
    %1319 = vst [vmem:[#allocation7 + $0x50] sm:$0xff] %v1233
    %1320 = vst [vmem:[#allocation7 + $0x58] sm:$0xff] %v1248
    %1321 = vst [vmem:[#allocation7 + $0x60] sm:$0xff] %v1263
    %1322 = vst [vmem:[#allocation7 + $0x68] sm:$0xff] %v1278
    %1323 = vst [vmem:[#allocation7 + $0x70] sm:$0xff] %v1293
    %1324 = vst [vmem:[#allocation7 + $0x78] sm:$0xff] %v1308
    %1341 = vrot.lane.b32.xlu0 %v320, 32
    %v1342 = vpop.permute.xlu0 %1341
    %1343 = vrot.lane.b32.xlu0 %v323, 32
    %v1344 = vpop.permute.xlu0 %1343
    %1345 = vrot.lane.b32.xlu0 %v326, 32
    %v1346 = vpop.permute.xlu0 %1345
    %1347 = vrot.lane.b32.xlu0 %v329, 32
    %v1348 = vpop.permute.xlu0 %1347
    %1349 = vrot.lane.b32.xlu0 %v332, 32
    %v1350 = vpop.permute.xlu0 %1349
    %1351 = vrot.lane.b32.xlu0 %v335, 32
    %v1352 = vpop.permute.xlu0 %1351
    %1353 = vrot.lane.b32.xlu0 %v338, 32
    %v1354 = vpop.permute.xlu0 %1353
    %1355 = vrot.lane.b32.xlu0 %v341, 32
    %v1356 = vpop.permute.xlu0 %1355
    %1357 = vrot.lane.b32.xlu0 %v344, 32
    %v1358 = vpop.permute.xlu0 %1357
    %1359 = vrot.lane.b32.xlu0 %v347, 32
    %v1360 = vpop.permute.xlu0 %1359
    %1361 = vrot.lane.b32.xlu0 %v350, 32
    %v1362 = vpop.permute.xlu0 %1361
    %1363 = vrot.lane.b32.xlu0 %v353, 32
    %v1364 = vpop.permute.xlu0 %1363
    %1365 = vrot.lane.b32.xlu0 %v356, 32
    %v1366 = vpop.permute.xlu0 %1365
    %1367 = vrot.lane.b32.xlu0 %v359, 32
    %v1368 = vpop.permute.xlu0 %1367
    %1369 = vrot.lane.b32.xlu0 %v362, 32
    %v1370 = vpop.permute.xlu0 %1369
    %1371 = vrot.lane.b32.xlu0 %v365, 32
    %v1372 = vpop.permute.xlu0 %1371
    %1389 = vrot.lane.b32.xlu0 %v534, 64
    %v1390 = vpop.permute.xlu0 %1389
    %1391 = vrot.lane.b32.xlu0 %v537, 64
    %v1392 = vpop.permute.xlu0 %1391
    %1393 = vrot.lane.b32.xlu0 %v540, 64
    %v1394 = vpop.permute.xlu0 %1393
    %1395 = vrot.lane.b32.xlu0 %v543, 64
    %v1396 = vpop.permute.xlu0 %1395
    %1397 = vrot.lane.b32.xlu0 %v546, 64
    %v1398 = vpop.permute.xlu0 %1397
    %1399 = vrot.lane.b32.xlu0 %v549, 64
    %v1400 = vpop.permute.xlu0 %1399
    %1401 = vrot.lane.b32.xlu0 %v552, 64
    %v1402 = vpop.permute.xlu0 %1401
    %1403 = vrot.lane.b32.xlu0 %v555, 64
    %v1404 = vpop.permute.xlu0 %1403
    %1405 = vrot.lane.b32.xlu0 %v558, 64
    %v1406 = vpop.permute.xlu0 %1405
    %1407 = vrot.lane.b32.xlu0 %v561, 64
    %v1408 = vpop.permute.xlu0 %1407
    %1409 = vrot.lane.b32.xlu0 %v564, 64
    %v1410 = vpop.permute.xlu0 %1409
    %1411 = vrot.lane.b32.xlu0 %v567, 64
    %v1412 = vpop.permute.xlu0 %1411
    %1413 = vrot.lane.b32.xlu0 %v570, 64
    %v1414 = vpop.permute.xlu0 %1413
    %1415 = vrot.lane.b32.xlu0 %v573, 64
    %v1416 = vpop.permute.xlu0 %1415
    %1417 = vrot.lane.b32.xlu0 %v576, 64
    %v1418 = vpop.permute.xlu0 %1417
    %1419 = vrot.lane.b32.xlu0 %v579, 64
    %v1420 = vpop.permute.xlu0 %1419
    %1453 = vrot.lane.b32.xlu0 %v599, 80
    %v1454 = vpop.permute.xlu0 %1453
    %1455 = vrot.lane.b32.xlu0 %v602, 80
    %v1456 = vpop.permute.xlu0 %1455
    %1457 = vrot.lane.b32.xlu0 %v605, 80
    %v1458 = vpop.permute.xlu0 %1457
    %1459 = vrot.lane.b32.xlu0 %v608, 80
    %v1460 = vpop.permute.xlu0 %1459
    %1461 = vrot.lane.b32.xlu0 %v611, 80
    %v1462 = vpop.permute.xlu0 %1461
    %1463 = vrot.lane.b32.xlu0 %v614, 80
    %v1464 = vpop.permute.xlu0 %1463
    %1465 = vrot.lane.b32.xlu0 %v617, 80
    %v1466 = vpop.permute.xlu0 %1465
    %1467 = vrot.lane.b32.xlu0 %v620, 80
    %v1468 = vpop.permute.xlu0 %1467
    %1469 = vrot.lane.b32.xlu0 %v623, 80
    %v1470 = vpop.permute.xlu0 %1469
    %1471 = vrot.lane.b32.xlu0 %v626, 80
    %v1472 = vpop.permute.xlu0 %1471
    %1473 = vrot.lane.b32.xlu0 %v629, 80
    %v1474 = vpop.permute.xlu0 %1473
    %1475 = vrot.lane.b32.xlu0 %v632, 80
    %v1476 = vpop.permute.xlu0 %1475
    %1477 = vrot.lane.b32.xlu0 %v635, 80
    %v1478 = vpop.permute.xlu0 %1477
    %1479 = vrot.lane.b32.xlu0 %v638, 80
    %v1480 = vpop.permute.xlu0 %1479
    %1481 = vrot.lane.b32.xlu0 %v641, 80
    %v1482 = vpop.permute.xlu0 %1481
    %1483 = vrot.lane.b32.xlu0 %v644, 80
    %v1484 = vpop.permute.xlu0 %1483
    %1501 = vrot.lane.b32.xlu0 %v780, 96
    %v1502 = vpop.permute.xlu0 %1501
    %1503 = vrot.lane.b32.xlu0 %v783, 96
    %v1504 = vpop.permute.xlu0 %1503
    %1505 = vrot.lane.b32.xlu0 %v786, 96
    %v1506 = vpop.permute.xlu0 %1505
    %1507 = vrot.lane.b32.xlu0 %v789, 96
    %v1508 = vpop.permute.xlu0 %1507
    %1509 = vrot.lane.b32.xlu0 %v792, 96
    %v1510 = vpop.permute.xlu0 %1509
    %1511 = vrot.lane.b32.xlu0 %v795, 96
    %v1512 = vpop.permute.xlu0 %1511
    %1513 = vrot.lane.b32.xlu0 %v798, 96
    %v1514 = vpop.permute.xlu0 %1513
    %1515 = vrot.lane.b32.xlu0 %v801, 96
    %v1516 = vpop.permute.xlu0 %1515
    %1517 = vrot.lane.b32.xlu0 %v804, 96
    %v1518 = vpop.permute.xlu0 %1517
    %1519 = vrot.lane.b32.xlu0 %v807, 96
    %v1520 = vpop.permute.xlu0 %1519
    %1521 = vrot.lane.b32.xlu0 %v810, 96
    %v1522 = vpop.permute.xlu0 %1521
    %1523 = vrot.lane.b32.xlu0 %v813, 96
    %v1524 = vpop.permute.xlu0 %1523
    %1525 = vrot.lane.b32.xlu0 %v816, 96
    %v1526 = vpop.permute.xlu0 %1525
    %1527 = vrot.lane.b32.xlu0 %v819, 96
    %v1528 = vpop.permute.xlu0 %1527
    %1529 = vrot.lane.b32.xlu0 %v822, 96
    %v1530 = vpop.permute.xlu0 %1529
    %1531 = vrot.lane.b32.xlu0 %v825, 96
    %v1532 = vpop.permute.xlu0 %1531
    %1565 = vrot.lane.b32.xlu0 %v845, 112
    %v1566 = vpop.permute.xlu0 %1565
    %1567 = vrot.lane.b32.xlu0 %v848, 112
    %v1568 = vpop.permute.xlu0 %1567
    %1569 = vrot.lane.b32.xlu0 %v851, 112
    %v1570 = vpop.permute.xlu0 %1569
    %1571 = vrot.lane.b32.xlu0 %v854, 112
    %v1572 = vpop.permute.xlu0 %1571
    %1573 = vrot.lane.b32.xlu0 %v857, 112
    %v1574 = vpop.permute.xlu0 %1573
    %1575 = vrot.lane.b32.xlu0 %v860, 112
    %v1576 = vpop.permute.xlu0 %1575
    %1577 = vrot.lane.b32.xlu0 %v863, 112
    %v1578 = vpop.permute.xlu0 %1577
    %1579 = vrot.lane.b32.xlu0 %v866, 112
    %v1580 = vpop.permute.xlu0 %1579
    %1581 = vrot.lane.b32.xlu0 %v869, 112
    %v1582 = vpop.permute.xlu0 %1581
    %1583 = vrot.lane.b32.xlu0 %v872, 112
    %v1584 = vpop.permute.xlu0 %1583
    %1585 = vrot.lane.b32.xlu0 %v875, 112
    %v1586 = vpop.permute.xlu0 %1585
    %1587 = vrot.lane.b32.xlu0 %v878, 112
    %v1588 = vpop.permute.xlu0 %1587
    %1589 = vrot.lane.b32.xlu0 %v881, 112
    %v1590 = vpop.permute.xlu0 %1589
    %1591 = vrot.lane.b32.xlu0 %v884, 112
    %v1592 = vpop.permute.xlu0 %1591
    %1593 = vrot.lane.b32.xlu0 %v887, 112
    %v1594 = vpop.permute.xlu0 %1593
    %1595 = vrot.lane.b32.xlu0 %v890, 112
    %v1596 = vpop.permute.xlu0 %1595
    %v1613 = vsel %vm91, %v255, %v1342
    %v1614 = vsel %vm91, %v258, %v1344
    %v1615 = vsel %vm91, %v261, %v1346
    %v1616 = vsel %vm91, %v264, %v1348
    %v1617 = vsel %vm91, %v267, %v1350
    %v1618 = vsel %vm91, %v270, %v1352
    %v1619 = vsel %vm91, %v273, %v1354
    %v1620 = vsel %vm91, %v276, %v1356
    %v1621 = vsel %vm91, %v279, %v1358
    %v1622 = vsel %vm91, %v282, %v1360
    %v1623 = vsel %vm91, %v285, %v1362
    %v1624 = vsel %vm91, %v288, %v1364
    %v1625 = vsel %vm91, %v291, %v1366
    %v1626 = vsel %vm91, %v294, %v1368
    %v1627 = vsel %vm91, %v297, %v1370
    %v1628 = vsel %vm91, %v300, %v1372
    %vm1629 = vcmask 523264
    %v1630 = vsel %vm1629, %v1613, %v1390
    %v1631 = vsel %vm1629, %v1614, %v1392
    %v1632 = vsel %vm1629, %v1615, %v1394
    %v1633 = vsel %vm1629, %v1616, %v1396
    %v1634 = vsel %vm1629, %v1617, %v1398
    %v1635 = vsel %vm1629, %v1618, %v1400
    %v1636 = vsel %vm1629, %v1619, %v1402
    %v1637 = vsel %vm1629, %v1620, %v1404
    %v1638 = vsel %vm1629, %v1621, %v1406
    %v1639 = vsel %vm1629, %v1622, %v1408
    %v1640 = vsel %vm1629, %v1623, %v1410
    %v1641 = vsel %vm1629, %v1624, %v1412
    %v1642 = vsel %vm1629, %v1625, %v1414
    %v1643 = vsel %vm1629, %v1626, %v1416
    %v1644 = vsel %vm1629, %v1627, %v1418
    %v1645 = vsel %vm1629, %v1628, %v1420
    %vm1646 = vcmask 654336
    %v1647 = vsel %vm1646, %v1630, %v1454
    %v1648 = vsel %vm1646, %v1631, %v1456
    %v1649 = vsel %vm1646, %v1632, %v1458
    %v1650 = vsel %vm1646, %v1633, %v1460
    %v1651 = vsel %vm1646, %v1634, %v1462
    %v1652 = vsel %vm1646, %v1635, %v1464
    %v1653 = vsel %vm1646, %v1636, %v1466
    %v1654 = vsel %vm1646, %v1637, %v1468
    %v1655 = vsel %vm1646, %v1638, %v1470
    %v1656 = vsel %vm1646, %v1639, %v1472
    %v1657 = vsel %vm1646, %v1640, %v1474
    %v1658 = vsel %vm1646, %v1641, %v1476
    %v1659 = vsel %vm1646, %v1642, %v1478
    %v1660 = vsel %vm1646, %v1643, %v1480
    %v1661 = vsel %vm1646, %v1644, %v1482
    %v1662 = vsel %vm1646, %v1645, %v1484
    %vm1663 = vcmask 785408
    %v1664 = vsel %vm1663, %v1647, %v1502
    %v1665 = vsel %vm1663, %v1648, %v1504
    %v1666 = vsel %vm1663, %v1649, %v1506
    %v1667 = vsel %vm1663, %v1650, %v1508
    %v1668 = vsel %vm1663, %v1651, %v1510
    %v1669 = vsel %vm1663, %v1652, %v1512
    %v1670 = vsel %vm1663, %v1653, %v1514
    %v1671 = vsel %vm1663, %v1654, %v1516
    %v1672 = vsel %vm1663, %v1655, %v1518
    %v1673 = vsel %vm1663, %v1656, %v1520
    %v1674 = vsel %vm1663, %v1657, %v1522
    %v1675 = vsel %vm1663, %v1658, %v1524
    %v1676 = vsel %vm1663, %v1659, %v1526
    %v1677 = vsel %vm1663, %v1660, %v1528
    %v1678 = vsel %vm1663, %v1661, %v1530
    %v1679 = vsel %vm1663, %v1662, %v1532
    %vm1680 = vcmask 916480
    %v1681 = vsel %vm1680, %v1664, %v1566
    %v1682 = vsel %vm1680, %v1665, %v1568
    %v1683 = vsel %vm1680, %v1666, %v1570
    %v1684 = vsel %vm1680, %v1667, %v1572
    %v1685 = vsel %vm1680, %v1668, %v1574
    %v1686 = vsel %vm1680, %v1669, %v1576
    %v1687 = vsel %vm1680, %v1670, %v1578
    %v1688 = vsel %vm1680, %v1671, %v1580
    %v1689 = vsel %vm1680, %v1672, %v1582
    %v1690 = vsel %vm1680, %v1673, %v1584
    %v1691 = vsel %vm1680, %v1674, %v1586
    %v1692 = vsel %vm1680, %v1675, %v1588
    %v1693 = vsel %vm1680, %v1676, %v1590
    %v1694 = vsel %vm1680, %v1677, %v1592
    %v1695 = vsel %vm1680, %v1678, %v1594
    %v1696 = vsel %vm1680, %v1679, %v1596
    %1697 = vst [vmem:[%s5] sm:$0xff] %v1681
    %1698 = vst [vmem:[%s5 + $0x8] sm:$0xff] %v1682
    %1699 = vst [vmem:[%s5 + $0x10] sm:$0xff] %v1683
    %1700 = vst [vmem:[%s5 + $0x18] sm:$0xff] %v1684
    %1701 = vst [vmem:[%s5 + $0x20] sm:$0xff] %v1685
    %1702 = vst [vmem:[%s5 + $0x28] sm:$0xff] %v1686
    %1703 = vst [vmem:[%s5 + $0x30] sm:$0xff] %v1687
    %1704 = vst [vmem:[%s5 + $0x38] sm:$0xff] %v1688
    %1705 = vst [vmem:[%s5 + $0x40] sm:$0xff] %v1689
    %1706 = vst [vmem:[%s5 + $0x48] sm:$0xff] %v1690
    %1707 = vst [vmem:[%s5 + $0x50] sm:$0xff] %v1691
    %1708 = vst [vmem:[%s5 + $0x58] sm:$0xff] %v1692
    %1709 = vst [vmem:[%s5 + $0x60] sm:$0xff] %v1693
    %1710 = vst [vmem:[%s5 + $0x68] sm:$0xff] %v1694
    %1711 = vst [vmem:[%s5 + $0x70] sm:$0xff] %v1695
    %1712 = vst [vmem:[%s5 + $0x78] sm:$0xff] %v1696
    // Predicated region
    $region30: #{_lambda_.1} parent=1 // pred_check
      _
    $region31: #{_lambda_.1} parent=1 // pred_check_branch
      %1714 = sbr.rel (0) target = $region33
    $region32: #{_lambda_.1} parent=1 // pred_region
      _
    $region33: #{_lambda_.1} parent=1 // pred_fallthru
      _
    // Predicated region
    $region34: #{_lambda_.1} parent=1 // pred_check
      _
    $region35: #{_lambda_.1} parent=1 // pred_check_branch
      %1716 = sbr.rel (0) target = $region37
    $region36: #{_lambda_.1} parent=1 // pred_region
      %1718 = vsyncadd [#allocation4], 0
      %s1719 = sshll.u32 [#allocation7], 4
      %s1720 = int_to_ptr.vmem [resolvable:$true] %s1719
      %s1721 = sshll.u32 %s6, 4
      %s1722 = int_to_ptr.hbm [resolvable:$true] %s1721
      %1727 = dma.vmem_to_hbm [thread:$0]  %s1720, 2048, %s1722, [#allocation4], 128, 128, 8
    $region37: #{_lambda_.1} parent=1 // pred_fallthru
      _
    // Predicated region
    $region38: #{_lambda_.1} parent=1 // pred_check
      _
    $region39: #{_lambda_.1} parent=1 // pred_check_branch
      %1729 = sbr.rel (0) target = $region41
    $region40: #{_lambda_.1} parent=1 // pred_region
      _
    $region41: #{_lambda_.1} parent=1 // pred_fallthru
      _
    // Predicated region
    $region42: #{_lambda_.1} parent=1 // pred_check
      _
    $region43: #{_lambda_.1} parent=1 // pred_check_branch
      %1731 = sbr.rel (0) target = $region45
    $region44: #{_lambda_.1} parent=1 // pred_region
      %1733 = dma.done [#allocation4], 2048
    $region45: #{_lambda_.1} parent=1 // pred_fallthru
      _
    %1734 = vsyncpa [#allocation3], 1
    %1735 = vsyncpa [#allocation6], 1
    %1736 = vsyncpa [#allocation4], 1

</llo_original>
